<compile_context>
chip_gen: v7x
topology: tpu7x:2x2x1
jax: 0.10.0
libtpu: 0.0.40
codegen_flags: <defaults>
</compile_context>

<pallas_src>
import functools
import math

import jax
import jax.numpy as jnp
from jax.experimental import pallas as pl
from jax.experimental.pallas import tpu as pltpu


def _layernorm(x, gamma, beta, eps=1e-5):
    mean = jnp.mean(x, axis=-1, keepdims=True)
    var = jnp.mean(jnp.square(x - mean), axis=-1, keepdims=True)
    return (x - mean) * jax.lax.rsqrt(var + eps) * gamma[None, :] + beta[None, :]


def _encoder_block_kernel(n_heads,
                          x_ref, mask_ref,
                          wqkv_ref, bqkv_ref, wo_ref, bo_ref,
                          g1_ref, be1_ref,
                          w1_ref, bh1_ref, w2_ref, bh2_ref,
                          g2_ref, be2_ref,
                          out_ref):
    # One grid step handles one batch element: full (S, E) tile resident in VMEM.
    x = x_ref[0]                               # (S, E) f32
    mask_add = mask_ref[0, 0][None, None, :]   # (1, 1, S) additive mask (hoisted broadcast)

    S, E = x.shape
    hd = E // n_heads
    scale = 1.0 / math.sqrt(hd)

    bf16 = jnp.bfloat16
    f32 = jnp.float32

    # ---- fused QKV projection: one wide bf16 MXU matmul, f32 accumulate ----
    x_bf = x.astype(bf16)
    qkv = jnp.dot(x_bf, wqkv_ref[...], preferred_element_type=f32) + bqkv_ref[0]  # (S,3E) f32

    # ---- head-major stacking: (S, 3E) -> (nh, S, hd) per q/k/v --------------
    # static lane slices + a major-axis stack (cheap layout ops, no per-head math)
    def head_stack(col0):
        return jnp.stack(
            [qkv[:, col0 + h * hd: col0 + (h + 1) * hd] for h in range(n_heads)],
            axis=0).astype(bf16)                                   # (nh, S, hd) bf16

    q = head_stack(0)
    k = head_stack(E)
    v = head_stack(2 * E)

    # ---- batched multi-head attention (softmax computed once for all heads) -
    s = jnp.einsum('hqd,hkd->hqk', q, k, preferred_element_type=f32)   # (nh,S,S) f32
    s = s * scale + mask_add
    s = s - jnp.max(s, axis=-1, keepdims=True)
    p = jnp.exp(s)
    p = p * pl.reciprocal(jnp.sum(p, axis=-1, keepdims=True), approx=True)   # EUP, not VALU div
    ctx = jnp.einsum('hqk,hkd->hqd', p.astype(bf16), v,
                     preferred_element_type=f32)                    # (nh,S,hd) f32

    # ---- output projection with the head-concat fused into the matmul -------
    # attn_out = sum_h ctx_h @ Wo[h*hd:(h+1)*hd, :]   (no lane-axis concatenate)
    wo = wo_ref[...]                        # (E, E) bf16
    ctx_bf = ctx.astype(bf16)
    attn_out = jnp.zeros((S, E), f32)
    for h in range(n_heads):
        attn_out = attn_out + jnp.dot(ctx_bf[h], wo[h * hd:(h + 1) * hd, :],
                                      preferred_element_type=f32)
    attn_out = attn_out + bo_ref[0]

    # ---- residual + LayerNorm 1 (dropout1 = identity) -----------------------
    h1 = _layernorm(x + attn_out, g1_ref[0], be1_ref[0])

    # ---- feed-forward: Linear -> (Dropout) -> ReLU -> Linear ----------------
    ff = jnp.dot(h1.astype(bf16), w1_ref[...], preferred_element_type=f32) + bh1_ref[0]
    ff = jnp.maximum(ff, 0.0)
    ff = jnp.dot(ff.astype(bf16), w2_ref[...], preferred_element_type=f32) + bh2_ref[0]

    # ---- residual + LayerNorm 2 (dropout2 = identity) -----------------------
    out = _layernorm(h1 + ff, g2_ref[0], be2_ref[0])
    out_ref[0] = out.astype(out_ref.dtype)


def encoder_block_pallas(x, key_padding_mask, params, n_heads):
    """x: (B, S, E) float32; key_padding_mask: (B, S) bool, True = ignore."""
    B, S, E = x.shape
    H = params["w1"].shape[-1]
    nh = n_heads
    hd = E // nh

    mask_add = jnp.where(key_padding_mask, -1e9, 0.0).astype(jnp.float32).reshape(B, 1, S)

    bf16 = jnp.bfloat16
    # Weight matrices in bf16 (MXU operands, half the VMEM/HBM bytes); biases
    # and LayerNorm params stay f32 (elementwise / accumulate path).
    ins = (
        x, mask_add,
        params["wqkv"].astype(bf16), params["bqkv"],
        params["wo"].astype(bf16),   params["bo"],
        params["g1"], params["be1"],
        params["w1"].astype(bf16),   params["bh1"],
        params["w2"].astype(bf16),   params["bh2"],
        params["g2"], params["be2"],
    )

    def full_spec(arr):
        nd = arr.ndim
        return pl.BlockSpec(arr.shape, lambda b, _nd=nd: (0,) * _nd)

    in_specs = [
        pl.BlockSpec((1, S, E), lambda b: (b, 0, 0)),   # x: one batch row per step
        pl.BlockSpec((1, 1, S), lambda b: (b, 0, 0)),   # mask: one batch row
    ] + [full_spec(a) for a in ins[2:]]                 # params fully resident

    out_spec = pl.BlockSpec((1, S, E), lambda b: (b, 0, 0))

    # ---- scoped-VMEM budget sized to the actual resident set ----------------
    f4, b2 = 4, 2
    est = ((E * 3 * E + E * E + E * H + H * E) * b2                    # bf16 weights
           + (3 * E + 6 * E + H) * f4                                  # biases + LN params
           + 2 * 2 * (S * E + S) * f4                                  # double-buffered x/out/mask
           + (S * 3 * E + 3 * nh * S * hd + 2 * nh * S * S             # qkv, q/k/v, scores+probs
              + S * H + 4 * S * E) * f4)                               # ffn mid + misc temps
    vmem_limit = int(min(100 * 2 ** 20, max(32 * 2 ** 20, 1.5 * est)))

    flops = B * (2 * S * E * 3 * E            # qkv projection
                 + 2 * 2 * nh * S * S * hd    # scores + p@v
                 + 2 * S * E * E              # output projection
                 + 2 * 2 * S * E * H)         # FFN
    transcendentals = B * (nh * S * S + nh * S + 2 * S)   # exp + recip + rsqrt
    bytes_accessed = sum(int(a.size) * a.dtype.itemsize for a in ins) + B * S * E * 4

    kernel = functools.partial(_encoder_block_kernel, n_heads)

    return pl.pallas_call(
        kernel,
        out_shape=jax.ShapeDtypeStruct((B, S, E), jnp.float32),
        grid_spec=pltpu.PrefetchScalarGridSpec(
            num_scalar_prefetch=0,
            grid=(B,),
            in_specs=in_specs,
            out_specs=out_spec,
        ),
        compiler_params=pltpu.CompilerParams(
            dimension_semantics=("parallel",),
            vmem_limit_bytes=vmem_limit),
        cost_estimate=pl.CostEstimate(
            flops=int(flops),
            transcendentals=int(transcendentals),
            bytes_accessed=int(bytes_accessed)),
    )(*ins)


def encoder_block_ref(x, key_padding_mask, params, n_heads):
    """Pure-JAX reference mirroring the kernel's math (bf16 MXU operands, f32 accum)."""
    B, S, E = x.shape
    hd = E // n_heads
    scale = 1.0 / math.sqrt(hd)
    f32, bf16 = jnp.float32, jnp.bfloat16

    def mm(a, w):
        return jnp.dot(a.astype(bf16), w.astype(bf16), preferred_element_type=f32)

    mask_add = jnp.where(key_padding_mask, -1e9, 0.0)[:, None, None, :]  # (B,1,1,S)

    qkv = (mm(x, params["wqkv"]) + params["bqkv"][0]).astype(bf16)
    q, k, v = jnp.split(qkv, 3, axis=-1)

    def split_heads(t):  # (B,S,E) -> (B,nh,S,hd)
        return t.reshape(B, S, n_heads, hd).transpose(0, 2, 1, 3)

    q, k, v = split_heads(q), split_heads(k), split_heads(v)
    s = jnp.einsum("bhqd,bhkd->bhqk", q, k, preferred_element_type=f32) * scale + mask_add
    p = jax.nn.softmax(s, axis=-1)
    ctx = jnp.einsum("bhqk,bhkd->bhqd", p.astype(bf16), v, preferred_element_type=f32)
    ctx = ctx.transpose(0, 2, 1, 3).reshape(B, S, E)
    attn_out = mm(ctx, params["wo"]) + params["bo"][0]

    def ln(t, g, b, eps=1e-5):
        m = jnp.mean(t, axis=-1, keepdims=True)
        var = jnp.mean(jnp.square(t - m), axis=-1, keepdims=True)
        return (t - m) * jax.lax.rsqrt(var + eps) * g[0] + b[0]

    h1 = ln(x + attn_out, params["g1"], params["be1"])
    ff = jnp.maximum(mm(h1, params["w1"]) + params["bh1"][0], 0.0)
    ff = mm(ff, params["w2"]) + params["bh2"][0]
    return ln(h1 + ff, params["g2"], params["be2"])


def make_params(key, n_features, n_heads, n_hidden):
    E, H = n_features, n_hidden
    ks = jax.random.split(key, 4)
    std = 0.02
    return {
        "wqkv": jax.random.normal(ks[0], (E, 3 * E), jnp.float32) * std,
        "bqkv": jnp.zeros((1, 3 * E), jnp.float32),
        "wo":   jax.random.normal(ks[1], (E, E), jnp.float32) * std,
        "bo":   jnp.zeros((1, E), jnp.float32),
        "g1":   jnp.ones((1, E), jnp.float32),
        "be1":  jnp.zeros((1, E), jnp.float32),
        "w1":   jax.random.normal(ks[2], (E, H), jnp.float32) * std,
        "bh1":  jnp.zeros((1, H), jnp.float32),
        "w2":   jax.random.normal(ks[3], (H, E), jnp.float32) * std,
        "bh2":  jnp.zeros((1, E), jnp.float32),
        "g2":   jnp.ones((1, E), jnp.float32),
        "be2":  jnp.zeros((1, E), jnp.float32),
    }


if __name__ == "__main__":
    B, S, E, NH, HID = 2, 8, 32, 4, 64

    key = jax.random.PRNGKey(0)
    kx, kp = jax.random.split(key)
    x = jax.random.normal(kx, (B, S, E), jnp.float32)

    # key_padding_mask: True = ignore that key position (pad). Mask the last
    # two positions of the second batch element.
    key_padding_mask = jnp.zeros((B, S), dtype=bool).at[1, -2:].set(True)

    params = make_params(kp, E, NH, HID)

    out = encoder_block_pallas(x, key_padding_mask, params, NH)
    out = jax.block_until_ready(out)

    ref = encoder_block_ref(x, key_padding_mask, params, NH)
    assert out.shape == (B, S, E)
    err = float(jnp.max(jnp.abs(out - ref)))
    assert err < 2e-2, f"mismatch vs reference: max abs err {err}"

    print("KERNEL_OK")
</pallas_src>

<mosaic_0001>
module attributes {stable_mosaic.version = 11 : i64} {
  func.func @_encoder_block_kernel(%arg0: i32, %arg1: memref<1x8x32xf32, #tpu.memory_space<vmem>>, %arg2: memref<1x1x8xf32, #tpu.memory_space<vmem>>, %arg3: memref<32x96xbf16, #tpu.memory_space<vmem>>, %arg4: memref<1x96xf32, #tpu.memory_space<vmem>>, %arg5: memref<32x32xbf16, #tpu.memory_space<vmem>>, %arg6: memref<1x32xf32, #tpu.memory_space<vmem>>, %arg7: memref<1x32xf32, #tpu.memory_space<vmem>>, %arg8: memref<1x32xf32, #tpu.memory_space<vmem>>, %arg9: memref<32x64xbf16, #tpu.memory_space<vmem>>, %arg10: memref<1x64xf32, #tpu.memory_space<vmem>>, %arg11: memref<64x32xbf16, #tpu.memory_space<vmem>>, %arg12: memref<1x32xf32, #tpu.memory_space<vmem>>, %arg13: memref<1x32xf32, #tpu.memory_space<vmem>>, %arg14: memref<1x32xf32, #tpu.memory_space<vmem>>, %arg15: memref<1x8x32xf32, #tpu.memory_space<vmem>>) attributes {dimension_semantics = [#tpu.dimension_semantics<parallel>], iteration_bounds = array<i64: 2>, scalar_prefetch = 0 : i64, scratch_operands = 0 : i64, tpu.core_type = #tpu.core_type<tc>, window_params = [{transform_indices = @transform_0, window_bounds = array<i64: 1, 8, 32>}, {transform_indices = @transform_1, window_bounds = array<i64: 1, 1, 8>}, {pipeline_mode = #tpu.pipeline_mode<synchronous>, transform_indices = @transform_2, window_bounds = array<i64: 32, 96>}, {pipeline_mode = #tpu.pipeline_mode<synchronous>, transform_indices = @transform_3, window_bounds = array<i64: 1, 96>}, {pipeline_mode = #tpu.pipeline_mode<synchronous>, transform_indices = @transform_4, window_bounds = array<i64: 32, 32>}, {pipeline_mode = #tpu.pipeline_mode<synchronous>, transform_indices = @transform_5, window_bounds = array<i64: 1, 32>}, {pipeline_mode = #tpu.pipeline_mode<synchronous>, transform_indices = @transform_6, window_bounds = array<i64: 1, 32>}, {pipeline_mode = #tpu.pipeline_mode<synchronous>, transform_indices = @transform_7, window_bounds = array<i64: 1, 32>}, {pipeline_mode = #tpu.pipeline_mode<synchronous>, transform_indices = @transform_8, window_bounds = array<i64: 32, 64>}, {pipeline_mode = #tpu.pipeline_mode<synchronous>, transform_indices = @transform_9, window_bounds = array<i64: 1, 64>}, {pipeline_mode = #tpu.pipeline_mode<synchronous>, transform_indices = @transform_10, window_bounds = array<i64: 64, 32>}, {pipeline_mode = #tpu.pipeline_mode<synchronous>, transform_indices = @transform_11, window_bounds = array<i64: 1, 32>}, {pipeline_mode = #tpu.pipeline_mode<synchronous>, transform_indices = @transform_12, window_bounds = array<i64: 1, 32>}, {pipeline_mode = #tpu.pipeline_mode<synchronous>, transform_indices = @transform_13, window_bounds = array<i64: 1, 32>}, {transform_indices = @transform_14, window_bounds = array<i64: 1, 8, 32>}]} {
    %c0 = arith.constant 0 : index
    %c0_0 = arith.constant 0 : index
    %c0_1 = arith.constant 0 : index
    %0 = vector.load %arg1[%c0, %c0_0, %c0_1] : memref<1x8x32xf32, #tpu.memory_space<vmem>>, vector<1x8x32xf32>
    %1 = vector.shape_cast %0 : vector<1x8x32xf32> to vector<8x32xf32>
    %c0_2 = arith.constant 0 : index
    %c0_3 = arith.constant 0 : index
    %c0_4 = arith.constant 0 : index
    %2 = vector.load %arg2[%c0_2, %c0_3, %c0_4] : memref<1x1x8xf32, #tpu.memory_space<vmem>>, vector<1x1x8xf32>
    %3 = vector.shape_cast %2 : vector<1x1x8xf32> to vector<8xf32>
    %4 = vector.shape_cast %3 : vector<8xf32> to vector<1x1x8xf32>
    %5 = arith.truncf %1 : vector<8x32xf32> to vector<8x32xbf16>
    %c0_5 = arith.constant 0 : index
    %c0_6 = arith.constant 0 : index
    %6 = vector.load %arg3[%c0_5, %c0_6] : memref<32x96xbf16, #tpu.memory_space<vmem>>, vector<32x96xbf16>
    %cst = arith.constant dense<0.000000e+00> : vector<8x96xf32>
    %7 = tpu.matmul %5, %6, %cst {dimension_numbers = #tpu.dot_dimension_numbers<[1], [0], [0], [1], [0, 0, 1, 1], [], []>} : vector<8x32xbf16>, vector<32x96xbf16>, vector<8x96xf32> -> vector<8x96xf32>
    %c0_7 = arith.constant 0 : index
    %c0_8 = arith.constant 0 : index
    %8 = vector.load %arg4[%c0_7, %c0_8] : memref<1x96xf32, #tpu.memory_space<vmem>>, vector<1x96xf32>
    %9 = vector.shape_cast %8 : vector<1x96xf32> to vector<96xf32>
    %10 = vector.shape_cast %9 : vector<96xf32> to vector<1x96xf32>
    %11 = vector.broadcast %10 : vector<1x96xf32> to vector<8x96xf32>
    %12 = arith.addf %7, %11 : vector<8x96xf32>
    %13 = vector.extract_strided_slice %12 {offsets = [0, 0], sizes = [8, 8], strides = [1, 1]} : vector<8x96xf32> to vector<8x8xf32>
    %14 = vector.extract_strided_slice %12 {offsets = [0, 8], sizes = [8, 8], strides = [1, 1]} : vector<8x96xf32> to vector<8x8xf32>
    %15 = vector.extract_strided_slice %12 {offsets = [0, 16], sizes = [8, 8], strides = [1, 1]} : vector<8x96xf32> to vector<8x8xf32>
    %16 = vector.extract_strided_slice %12 {offsets = [0, 24], sizes = [8, 8], strides = [1, 1]} : vector<8x96xf32> to vector<8x8xf32>
    %17 = vector.shape_cast %13 : vector<8x8xf32> to vector<1x8x8xf32>
    %18 = vector.shape_cast %14 : vector<8x8xf32> to vector<1x8x8xf32>
    %19 = vector.shape_cast %15 : vector<8x8xf32> to vector<1x8x8xf32>
    %20 = vector.shape_cast %16 : vector<8x8xf32> to vector<1x8x8xf32>
    %21 = tpu.concatenate %17, %18, %19, %20 in 0 : vector<1x8x8xf32>, vector<1x8x8xf32>, vector<1x8x8xf32>, vector<1x8x8xf32> -> vector<4x8x8xf32>
    %22 = arith.truncf %21 : vector<4x8x8xf32> to vector<4x8x8xbf16>
    %23 = vector.extract_strided_slice %12 {offsets = [0, 32], sizes = [8, 8], strides = [1, 1]} : vector<8x96xf32> to vector<8x8xf32>
    %24 = vector.extract_strided_slice %12 {offsets = [0, 40], sizes = [8, 8], strides = [1, 1]} : vector<8x96xf32> to vector<8x8xf32>
    %25 = vector.extract_strided_slice %12 {offsets = [0, 48], sizes = [8, 8], strides = [1, 1]} : vector<8x96xf32> to vector<8x8xf32>
    %26 = vector.extract_strided_slice %12 {offsets = [0, 56], sizes = [8, 8], strides = [1, 1]} : vector<8x96xf32> to vector<8x8xf32>
    %27 = vector.shape_cast %23 : vector<8x8xf32> to vector<1x8x8xf32>
    %28 = vector.shape_cast %24 : vector<8x8xf32> to vector<1x8x8xf32>
    %29 = vector.shape_cast %25 : vector<8x8xf32> to vector<1x8x8xf32>
    %30 = vector.shape_cast %26 : vector<8x8xf32> to vector<1x8x8xf32>
    %31 = tpu.concatenate %27, %28, %29, %30 in 0 : vector<1x8x8xf32>, vector<1x8x8xf32>, vector<1x8x8xf32>, vector<1x8x8xf32> -> vector<4x8x8xf32>
    %32 = arith.truncf %31 : vector<4x8x8xf32> to vector<4x8x8xbf16>
    %33 = vector.extract_strided_slice %12 {offsets = [0, 64], sizes = [8, 8], strides = [1, 1]} : vector<8x96xf32> to vector<8x8xf32>
    %34 = vector.extract_strided_slice %12 {offsets = [0, 72], sizes = [8, 8], strides = [1, 1]} : vector<8x96xf32> to vector<8x8xf32>
    %35 = vector.extract_strided_slice %12 {offsets = [0, 80], sizes = [8, 8], strides = [1, 1]} : vector<8x96xf32> to vector<8x8xf32>
    %36 = vector.extract_strided_slice %12 {offsets = [0, 88], sizes = [8, 8], strides = [1, 1]} : vector<8x96xf32> to vector<8x8xf32>
    %37 = vector.shape_cast %33 : vector<8x8xf32> to vector<1x8x8xf32>
    %38 = vector.shape_cast %34 : vector<8x8xf32> to vector<1x8x8xf32>
    %39 = vector.shape_cast %35 : vector<8x8xf32> to vector<1x8x8xf32>
    %40 = vector.shape_cast %36 : vector<8x8xf32> to vector<1x8x8xf32>
    %41 = tpu.concatenate %37, %38, %39, %40 in 0 : vector<1x8x8xf32>, vector<1x8x8xf32>, vector<1x8x8xf32>, vector<1x8x8xf32> -> vector<4x8x8xf32>
    %42 = arith.truncf %41 : vector<4x8x8xf32> to vector<4x8x8xbf16>
    "tpu.trace_start"() <{level = 10 : i32, message = "hqd,hkd->hqk"}> : () -> ()
    %cst_9 = arith.constant dense<0.000000e+00> : vector<4x8x8xf32>
    %43 = tpu.matmul %22, %32, %cst_9 {dimension_numbers = #tpu.dot_dimension_numbers<[2], [2], [1], [1], [0, 0, 0, 1, 1, 1], [0], [0]>} : vector<4x8x8xbf16>, vector<4x8x8xbf16>, vector<4x8x8xf32> -> vector<4x8x8xf32>
    "tpu.trace_stop"() : () -> ()
    %cst_10 = arith.constant 0.353553385 : f32
    %44 = vector.broadcast %cst_10 : f32 to vector<4x8x8xf32>
    %45 = arith.mulf %43, %44 : vector<4x8x8xf32>
    %46 = vector.broadcast %4 : vector<1x1x8xf32> to vector<4x8x8xf32>
    %47 = arith.addf %45, %46 : vector<4x8x8xf32>
    %cst_11 = arith.constant dense<0xFF800000> : vector<4x8xf32>
    %48 = vector.multi_reduction <maximumf>, %47, %cst_11 [2] : vector<4x8x8xf32> to vector<4x8xf32>
    %49 = vector.shape_cast %48 : vector<4x8xf32> to vector<4x8x1xf32>
    %50 = vector.broadcast %49 : vector<4x8x1xf32> to vector<4x8x8xf32>
    %51 = arith.subf %47, %50 : vector<4x8x8xf32>
    %52 = math.exp %51 : vector<4x8x8xf32>
    %cst_12 = arith.constant dense<0.000000e+00> : vector<4x8xf32>
    %53 = vector.multi_reduction <add>, %52, %cst_12 [2] : vector<4x8x8xf32> to vector<4x8xf32>
    %54 = vector.shape_cast %53 : vector<4x8xf32> to vector<4x8x1xf32>
    %55 = tpu.reciprocal %54 {approx = true} : vector<4x8x1xf32> -> vector<4x8x1xf32>
    %56 = vector.broadcast %55 : vector<4x8x1xf32> to vector<4x8x8xf32>
    %57 = arith.mulf %52, %56 : vector<4x8x8xf32>
    %58 = arith.truncf %57 : vector<4x8x8xf32> to vector<4x8x8xbf16>
    "tpu.trace_start"() <{level = 10 : i32, message = "hqk,hkd->hqd"}> : () -> ()
    %cst_13 = arith.constant dense<0.000000e+00> : vector<4x8x8xf32>
    %59 = tpu.matmul %58, %42, %cst_13 {dimension_numbers = #tpu.dot_dimension_numbers<[2], [1], [1], [2], [0, 0, 0, 1, 1, 2], [0], [0]>} : vector<4x8x8xbf16>, vector<4x8x8xbf16>, vector<4x8x8xf32> -> vector<4x8x8xf32>
    "tpu.trace_stop"() : () -> ()
    %c0_14 = arith.constant 0 : index
    %c0_15 = arith.constant 0 : index
    %60 = vector.load %arg5[%c0_14, %c0_15] : memref<32x32xbf16, #tpu.memory_space<vmem>>, vector<32x32xbf16>
    %61 = arith.truncf %59 : vector<4x8x8xf32> to vector<4x8x8xbf16>
    %cst_16 = arith.constant 0.000000e+00 : f32
    %62 = vector.broadcast %cst_16 : f32 to vector<8x32xf32>
    %63 = vector.extract_strided_slice %61 {offsets = [0, 0, 0], sizes = [1, 8, 8], strides = [1, 1, 1]} : vector<4x8x8xbf16> to vector<1x8x8xbf16>
    %64 = vector.shape_cast %63 : vector<1x8x8xbf16> to vector<8x8xbf16>
    %65 = vector.extract_strided_slice %60 {offsets = [0, 0], sizes = [8, 32], strides = [1, 1]} : vector<32x32xbf16> to vector<8x32xbf16>
    %cst_17 = arith.constant dense<0.000000e+00> : vector<8x32xf32>
    %66 = tpu.matmul %64, %65, %cst_17 {dimension_numbers = #tpu.dot_dimension_numbers<[1], [0], [0], [1], [0, 0, 1, 1], [], []>} : vector<8x8xbf16>, vector<8x32xbf16>, vector<8x32xf32> -> vector<8x32xf32>
    %67 = arith.addf %62, %66 : vector<8x32xf32>
    %68 = vector.extract_strided_slice %61 {offsets = [1, 0, 0], sizes = [1, 8, 8], strides = [1, 1, 1]} : vector<4x8x8xbf16> to vector<1x8x8xbf16>
    %69 = vector.shape_cast %68 : vector<1x8x8xbf16> to vector<8x8xbf16>
    %70 = vector.extract_strided_slice %60 {offsets = [8, 0], sizes = [8, 32], strides = [1, 1]} : vector<32x32xbf16> to vector<8x32xbf16>
    %cst_18 = arith.constant dense<0.000000e+00> : vector<8x32xf32>
    %71 = tpu.matmul %69, %70, %cst_18 {dimension_numbers = #tpu.dot_dimension_numbers<[1], [0], [0], [1], [0, 0, 1, 1], [], []>} : vector<8x8xbf16>, vector<8x32xbf16>, vector<8x32xf32> -> vector<8x32xf32>
    %72 = arith.addf %67, %71 : vector<8x32xf32>
    %73 = vector.extract_strided_slice %61 {offsets = [2, 0, 0], sizes = [1, 8, 8], strides = [1, 1, 1]} : vector<4x8x8xbf16> to vector<1x8x8xbf16>
    %74 = vector.shape_cast %73 : vector<1x8x8xbf16> to vector<8x8xbf16>
    %75 = vector.extract_strided_slice %60 {offsets = [16, 0], sizes = [8, 32], strides = [1, 1]} : vector<32x32xbf16> to vector<8x32xbf16>
    %cst_19 = arith.constant dense<0.000000e+00> : vector<8x32xf32>
    %76 = tpu.matmul %74, %75, %cst_19 {dimension_numbers = #tpu.dot_dimension_numbers<[1], [0], [0], [1], [0, 0, 1, 1], [], []>} : vector<8x8xbf16>, vector<8x32xbf16>, vector<8x32xf32> -> vector<8x32xf32>
    %77 = arith.addf %72, %76 : vector<8x32xf32>
    %78 = vector.extract_strided_slice %61 {offsets = [3, 0, 0], sizes = [1, 8, 8], strides = [1, 1, 1]} : vector<4x8x8xbf16> to vector<1x8x8xbf16>
    %79 = vector.shape_cast %78 : vector<1x8x8xbf16> to vector<8x8xbf16>
    %80 = vector.extract_strided_slice %60 {offsets = [24, 0], sizes = [8, 32], strides = [1, 1]} : vector<32x32xbf16> to vector<8x32xbf16>
    %cst_20 = arith.constant dense<0.000000e+00> : vector<8x32xf32>
    %81 = tpu.matmul %79, %80, %cst_20 {dimension_numbers = #tpu.dot_dimension_numbers<[1], [0], [0], [1], [0, 0, 1, 1], [], []>} : vector<8x8xbf16>, vector<8x32xbf16>, vector<8x32xf32> -> vector<8x32xf32>
    %82 = arith.addf %77, %81 : vector<8x32xf32>
    %c0_21 = arith.constant 0 : index
    %c0_22 = arith.constant 0 : index
    %83 = vector.load %arg6[%c0_21, %c0_22] : memref<1x32xf32, #tpu.memory_space<vmem>>, vector<1x32xf32>
    %84 = vector.shape_cast %83 : vector<1x32xf32> to vector<32xf32>
    %85 = vector.shape_cast %84 : vector<32xf32> to vector<1x32xf32>
    %86 = vector.broadcast %85 : vector<1x32xf32> to vector<8x32xf32>
    %87 = arith.addf %82, %86 : vector<8x32xf32>
    %88 = arith.addf %1, %87 : vector<8x32xf32>
    %c0_23 = arith.constant 0 : index
    %c0_24 = arith.constant 0 : index
    %89 = vector.load %arg7[%c0_23, %c0_24] : memref<1x32xf32, #tpu.memory_space<vmem>>, vector<1x32xf32>
    %90 = vector.shape_cast %89 : vector<1x32xf32> to vector<32xf32>
    %c0_25 = arith.constant 0 : index
    %c0_26 = arith.constant 0 : index
    %91 = vector.load %arg8[%c0_25, %c0_26] : memref<1x32xf32, #tpu.memory_space<vmem>>, vector<1x32xf32>
    %92 = vector.shape_cast %91 : vector<1x32xf32> to vector<32xf32>
    %cst_27 = arith.constant dense<0.000000e+00> : vector<8xf32>
    %93 = vector.multi_reduction <add>, %88, %cst_27 [1] : vector<8x32xf32> to vector<8xf32>
    %94 = vector.shape_cast %93 : vector<8xf32> to vector<8x1xf32>
    %cst_28 = arith.constant 3.200000e+01 : f32
    %95 = vector.broadcast %cst_28 : f32 to vector<8x1xf32>
    %96 = arith.divf %94, %95 : vector<8x1xf32>
    %97 = vector.broadcast %96 : vector<8x1xf32> to vector<8x32xf32>
    %98 = arith.subf %88, %97 : vector<8x32xf32>
    %99 = arith.mulf %98, %98 : vector<8x32xf32>
    %cst_29 = arith.constant dense<0.000000e+00> : vector<8xf32>
    %100 = vector.multi_reduction <add>, %99, %cst_29 [1] : vector<8x32xf32> to vector<8xf32>
    %101 = vector.shape_cast %100 : vector<8xf32> to vector<8x1xf32>
    %cst_30 = arith.constant 3.200000e+01 : f32
    %102 = vector.broadcast %cst_30 : f32 to vector<8x1xf32>
    %103 = arith.divf %101, %102 : vector<8x1xf32>
    %104 = vector.broadcast %96 : vector<8x1xf32> to vector<8x32xf32>
    %105 = arith.subf %88, %104 : vector<8x32xf32>
    %cst_31 = arith.constant 9.99999974E-6 : f32
    %106 = vector.broadcast %cst_31 : f32 to vector<8x1xf32>
    %107 = arith.addf %103, %106 : vector<8x1xf32>
    %108 = math.rsqrt %107 : vector<8x1xf32>
    %109 = vector.broadcast %108 : vector<8x1xf32> to vector<8x32xf32>
    %110 = arith.mulf %105, %109 : vector<8x32xf32>
    %111 = vector.shape_cast %90 : vector<32xf32> to vector<1x32xf32>
    %112 = vector.broadcast %111 : vector<1x32xf32> to vector<8x32xf32>
    %113 = arith.mulf %110, %112 : vector<8x32xf32>
    %114 = vector.shape_cast %92 : vector<32xf32> to vector<1x32xf32>
    %115 = vector.broadcast %114 : vector<1x32xf32> to vector<8x32xf32>
    %116 = arith.addf %113, %115 : vector<8x32xf32>
    %117 = arith.truncf %116 : vector<8x32xf32> to vector<8x32xbf16>
    %c0_32 = arith.constant 0 : index
    %c0_33 = arith.constant 0 : index
    %118 = vector.load %arg9[%c0_32, %c0_33] : memref<32x64xbf16, #tpu.memory_space<vmem>>, vector<32x64xbf16>
    %cst_34 = arith.constant dense<0.000000e+00> : vector<8x64xf32>
    %119 = tpu.matmul %117, %118, %cst_34 {dimension_numbers = #tpu.dot_dimension_numbers<[1], [0], [0], [1], [0, 0, 1, 1], [], []>} : vector<8x32xbf16>, vector<32x64xbf16>, vector<8x64xf32> -> vector<8x64xf32>
    %c0_35 = arith.constant 0 : index
    %c0_36 = arith.constant 0 : index
    %120 = vector.load %arg10[%c0_35, %c0_36] : memref<1x64xf32, #tpu.memory_space<vmem>>, vector<1x64xf32>
    %121 = vector.shape_cast %120 : vector<1x64xf32> to vector<64xf32>
    %122 = vector.shape_cast %121 : vector<64xf32> to vector<1x64xf32>
    %123 = vector.broadcast %122 : vector<1x64xf32> to vector<8x64xf32>
    %124 = arith.addf %119, %123 : vector<8x64xf32>
    %cst_37 = arith.constant 0.000000e+00 : f32
    %125 = vector.broadcast %cst_37 : f32 to vector<8x64xf32>
    %126 = arith.maximumf %124, %125 : vector<8x64xf32>
    %127 = arith.truncf %126 : vector<8x64xf32> to vector<8x64xbf16>
    %c0_38 = arith.constant 0 : index
    %c0_39 = arith.constant 0 : index
    %128 = vector.load %arg11[%c0_38, %c0_39] : memref<64x32xbf16, #tpu.memory_space<vmem>>, vector<64x32xbf16>
    %cst_40 = arith.constant dense<0.000000e+00> : vector<8x32xf32>
    %129 = tpu.matmul %127, %128, %cst_40 {dimension_numbers = #tpu.dot_dimension_numbers<[1], [0], [0], [1], [0, 0, 1, 1], [], []>} : vector<8x64xbf16>, vector<64x32xbf16>, vector<8x32xf32> -> vector<8x32xf32>
    %c0_41 = arith.constant 0 : index
    %c0_42 = arith.constant 0 : index
    %130 = vector.load %arg12[%c0_41, %c0_42] : memref<1x32xf32, #tpu.memory_space<vmem>>, vector<1x32xf32>
    %131 = vector.shape_cast %130 : vector<1x32xf32> to vector<32xf32>
    %132 = vector.shape_cast %131 : vector<32xf32> to vector<1x32xf32>
    %133 = vector.broadcast %132 : vector<1x32xf32> to vector<8x32xf32>
    %134 = arith.addf %129, %133 : vector<8x32xf32>
    %135 = arith.addf %116, %134 : vector<8x32xf32>
    %c0_43 = arith.constant 0 : index
    %c0_44 = arith.constant 0 : index
    %136 = vector.load %arg13[%c0_43, %c0_44] : memref<1x32xf32, #tpu.memory_space<vmem>>, vector<1x32xf32>
    %137 = vector.shape_cast %136 : vector<1x32xf32> to vector<32xf32>
    %c0_45 = arith.constant 0 : index
    %c0_46 = arith.constant 0 : index
    %138 = vector.load %arg14[%c0_45, %c0_46] : memref<1x32xf32, #tpu.memory_space<vmem>>, vector<1x32xf32>
    %139 = vector.shape_cast %138 : vector<1x32xf32> to vector<32xf32>
    %cst_47 = arith.constant dense<0.000000e+00> : vector<8xf32>
    %140 = vector.multi_reduction <add>, %135, %cst_47 [1] : vector<8x32xf32> to vector<8xf32>
    %141 = vector.shape_cast %140 : vector<8xf32> to vector<8x1xf32>
    %cst_48 = arith.constant 3.200000e+01 : f32
    %142 = vector.broadcast %cst_48 : f32 to vector<8x1xf32>
    %143 = arith.divf %141, %142 : vector<8x1xf32>
    %144 = vector.broadcast %143 : vector<8x1xf32> to vector<8x32xf32>
    %145 = arith.subf %135, %144 : vector<8x32xf32>
    %146 = arith.mulf %145, %145 : vector<8x32xf32>
    %cst_49 = arith.constant dense<0.000000e+00> : vector<8xf32>
    %147 = vector.multi_reduction <add>, %146, %cst_49 [1] : vector<8x32xf32> to vector<8xf32>
    %148 = vector.shape_cast %147 : vector<8xf32> to vector<8x1xf32>
    %cst_50 = arith.constant 3.200000e+01 : f32
    %149 = vector.broadcast %cst_50 : f32 to vector<8x1xf32>
    %150 = arith.divf %148, %149 : vector<8x1xf32>
    %151 = vector.broadcast %143 : vector<8x1xf32> to vector<8x32xf32>
    %152 = arith.subf %135, %151 : vector<8x32xf32>
    %cst_51 = arith.constant 9.99999974E-6 : f32
    %153 = vector.broadcast %cst_51 : f32 to vector<8x1xf32>
    %154 = arith.addf %150, %153 : vector<8x1xf32>
    %155 = math.rsqrt %154 : vector<8x1xf32>
    %156 = vector.broadcast %155 : vector<8x1xf32> to vector<8x32xf32>
    %157 = arith.mulf %152, %156 : vector<8x32xf32>
    %158 = vector.shape_cast %137 : vector<32xf32> to vector<1x32xf32>
    %159 = vector.broadcast %158 : vector<1x32xf32> to vector<8x32xf32>
    %160 = arith.mulf %157, %159 : vector<8x32xf32>
    %161 = vector.shape_cast %139 : vector<32xf32> to vector<1x32xf32>
    %162 = vector.broadcast %161 : vector<1x32xf32> to vector<8x32xf32>
    %163 = arith.addf %160, %162 : vector<8x32xf32>
    %c0_52 = arith.constant 0 : index
    %c0_53 = arith.constant 0 : index
    %c0_54 = arith.constant 0 : index
    %164 = vector.load %arg15[%c0_52, %c0_53, %c0_54] : memref<1x8x32xf32, #tpu.memory_space<vmem>>, vector<1x8x32xf32>
    %165 = vector.shape_cast %164 : vector<1x8x32xf32> to vector<8x32xf32>
    %166 = vector.shape_cast %163 : vector<8x32xf32> to vector<1x8x32xf32>
    tpu.vector_store %arg15[%c0_52, %c0_53, %c0_54], %166 {strides = array<i32>} : memref<1x8x32xf32, #tpu.memory_space<vmem>>, vector<1x8x32xf32>,
    return
  }
  func.func @transform_0(%arg0: i32) -> (i32, i32, i32) {
    %c0_i32 = arith.constant 0 : i32
    %c0_i32_0 = arith.constant 0 : i32
    %c0_i32_1 = arith.constant 0 : i32
    return %arg0, %c0_i32, %c0_i32_0 : i32, i32, i32
  }
  func.func @transform_1(%arg0: i32) -> (i32, i32, i32) {
    %c0_i32 = arith.constant 0 : i32
    %c0_i32_0 = arith.constant 0 : i32
    %c0_i32_1 = arith.constant 0 : i32
    return %arg0, %c0_i32, %c0_i32_0 : i32, i32, i32
  }
  func.func @transform_2(%arg0: i32) -> (i32, i32) {
    %c0_i32 = arith.constant 0 : i32
    %c0_i32_0 = arith.constant 0 : i32
    %c0_i32_1 = arith.constant 0 : i32
    return %c0_i32, %c0_i32_0 : i32, i32
  }
  func.func @transform_3(%arg0: i32) -> (i32, i32) {
    %c0_i32 = arith.constant 0 : i32
    %c0_i32_0 = arith.constant 0 : i32
    %c0_i32_1 = arith.constant 0 : i32
    return %c0_i32, %c0_i32_0 : i32, i32
  }
  func.func @transform_4(%arg0: i32) -> (i32, i32) {
    %c0_i32 = arith.constant 0 : i32
    %c0_i32_0 = arith.constant 0 : i32
    %c0_i32_1 = arith.constant 0 : i32
    return %c0_i32, %c0_i32_0 : i32, i32
  }
  func.func @transform_5(%arg0: i32) -> (i32, i32) {
    %c0_i32 = arith.constant 0 : i32
    %c0_i32_0 = arith.constant 0 : i32
    %c0_i32_1 = arith.constant 0 : i32
    return %c0_i32, %c0_i32_0 : i32, i32
  }
  func.func @transform_6(%arg0: i32) -> (i32, i32) {
    %c0_i32 = arith.constant 0 : i32
    %c0_i32_0 = arith.constant 0 : i32
    %c0_i32_1 = arith.constant 0 : i32
    return %c0_i32, %c0_i32_0 : i32, i32
  }
  func.func @transform_7(%arg0: i32) -> (i32, i32) {
    %c0_i32 = arith.constant 0 : i32
    %c0_i32_0 = arith.constant 0 : i32
    %c0_i32_1 = arith.constant 0 : i32
    return %c0_i32, %c0_i32_0 : i32, i32
  }
  func.func @transform_8(%arg0: i32) -> (i32, i32) {
    %c0_i32 = arith.constant 0 : i32
    %c0_i32_0 = arith.constant 0 : i32
    %c0_i32_1 = arith.constant 0 : i32
    return %c0_i32, %c0_i32_0 : i32, i32
  }
  func.func @transform_9(%arg0: i32) -> (i32, i32) {
    %c0_i32 = arith.constant 0 : i32
    %c0_i32_0 = arith.constant 0 : i32
    %c0_i32_1 = arith.constant 0 : i32
    return %c0_i32, %c0_i32_0 : i32, i32
  }
  func.func @transform_10(%arg0: i32) -> (i32, i32) {
    %c0_i32 = arith.constant 0 : i32
    %c0_i32_0 = arith.constant 0 : i32
    %c0_i32_1 = arith.constant 0 : i32
    return %c0_i32, %c0_i32_0 : i32, i32
  }
  func.func @transform_11(%arg0: i32) -> (i32, i32) {
    %c0_i32 = arith.constant 0 : i32
    %c0_i32_0 = arith.constant 0 : i32
    %c0_i32_1 = arith.constant 0 : i32
    return %c0_i32, %c0_i32_0 : i32, i32
  }
  func.func @transform_12(%arg0: i32) -> (i32, i32) {
    %c0_i32 = arith.constant 0 : i32
    %c0_i32_0 = arith.constant 0 : i32
    %c0_i32_1 = arith.constant 0 : i32
    return %c0_i32, %c0_i32_0 : i32, i32
  }
  func.func @transform_13(%arg0: i32) -> (i32, i32) {
    %c0_i32 = arith.constant 0 : i32
    %c0_i32_0 = arith.constant 0 : i32
    %c0_i32_1 = arith.constant 0 : i32
    return %c0_i32, %c0_i32_0 : i32, i32
  }
  func.func @transform_14(%arg0: i32) -> (i32, i32, i32) {
    %c0_i32 = arith.constant 0 : i32
    %c0_i32_0 = arith.constant 0 : i32
    %c0_i32_1 = arith.constant 0 : i32
    return %arg0, %c0_i32, %c0_i32_0 : i32, i32, i32
  }
}

</mosaic_0001>

<llo_original>
// kernel: tpu_custom_call.1
$region0: #{tpu_custom_call.1}
  #allocation0 [shape = 'u32[]', space=smem, size = 0x4, offset = 0x4, fixed_abs, tag = 'smem constant byte address 0x4 - core index']
  #allocation1 [shape = 'u32[144,128]{1,0:T(1,128)}', space=vmem, size = 0x12000, scoped, tag = 'internal scratch']
  %s0 = inlined_call_operand.vmem [shape: f32[2,8,32], index: 0, kind: input, shape index: {}]
  %s1 = inlined_call_operand.vmem [shape: f32[2,1,8], index: 1, kind: input, shape index: {}]
  %s2 = inlined_call_operand.vmem [shape: bf16[32,96], index: 2, kind: input, shape index: {}]
  %s3 = inlined_call_operand.vmem [shape: f32[1,96], index: 3, kind: input, shape index: {}]
  %s4 = inlined_call_operand.vmem [shape: bf16[32,32], index: 4, kind: input, shape index: {}]
  %s5 = inlined_call_operand.vmem [shape: f32[1,32], index: 5, kind: input, shape index: {}]
  %s6 = inlined_call_operand.vmem [shape: f32[1,32], index: 6, kind: input, shape index: {}]
  %s7 = inlined_call_operand.vmem [shape: f32[1,32], index: 7, kind: input, shape index: {}]
  %s8 = inlined_call_operand.hbm [shape: bf16[32,64], index: 8, kind: input, shape index: {}]
  %s9 = inlined_call_operand.vmem [shape: f32[1,64], index: 9, kind: input, shape index: {}]
  %s10 = inlined_call_operand.vmem [shape: bf16[64,32], index: 10, kind: input, shape index: {}]
  %s11 = inlined_call_operand.vmem [shape: f32[1,32], index: 11, kind: input, shape index: {}]
  %s12 = inlined_call_operand.vmem [shape: f32[1,32], index: 12, kind: input, shape index: {}]
  %s13 = inlined_call_operand.vmem [shape: f32[1,32], index: 13, kind: input, shape index: {}]
  %s14 = inlined_call_operand.hbm [shape: f32[2,8,32], index: 14, kind: output, shape index: {}]
  %s15 = sld [smem:[#allocation0]]
  $region93: #{tpu_custom_call.1} parent=0
    _
  %s17 = ssub.s32 1, %s15
  %s18 = scalar_select 0, %s17, %s15
  $region1: #{tpu_custom_call.1} parent=0
    #allocation2 [shape = 'u8[8192]{0}', space=vmem, size = 0x2000, scoped, tag = 'input window, operand 8, single buffered']
    #allocation3 [shape = 's32[2]{0}', space=sflag, size = 0x8, scoped, tag = 'scoped memory for tpu_custom_call.1']
    #allocation4 [shape = 's32[2]{0}', space=sflag, size = 0x8, scoped, tag = 'scoped memory for tpu_custom_call.1']
    #allocation5 [shape = 'u8[8192]{0}', space=vmem, size = 0x2000, scoped, tag = 'output window, operand 0']
    %19 = vsyncpa [#allocation3], 0
    %20 = vsyncpa [#allocation4], 0
    %s21 = scalar_lea.sflag [#allocation4], 1
    %22 = vsyncpa %s21, 0
    loop: start=0, step=1, limit=4
    $region2: #{tpu_custom_call.1} parent=1 // loop_pre_header
      _
    $region3: #{tpu_custom_call.1} parent=1 // loop_header
      %s24 = sphi 0, %s28
      %p25 = scmp.ge.s32.totalorder %s24, 4
      %s34 = sphi 0, %s36
      %s37 = sphi 0, %s34
      %s38 = sphi 0, %s37
      %s54 = sphi 0, %s38
      %s60 = sphi 0, %s62
      %s63 = sphi 0, %s60
      %s64 = sphi 0, %s63
      %s80 = sphi 0, %s64
      %s84 = sphi 0, %s84
      %s86 = sphi 0, %s84
      %s87 = sphi 0, %s86
      %s101 = sphi 0, %s87
      %s105 = sphi 0, %s105
      %s107 = sphi 0, %s105
      %s108 = sphi 0, %s107
      %s122 = sphi 0, %s108
      %s126 = sphi 0, %s126
      %s128 = sphi 0, %s126
      %s129 = sphi 0, %s128
      %s143 = sphi 0, %s129
      %s147 = sphi 0, %s147
      %s149 = sphi 0, %s147
      %s150 = sphi 0, %s149
      %s164 = sphi 0, %s150
      %s168 = sphi 0, %s168
      %s170 = sphi 0, %s168
      %s171 = sphi 0, %s170
      %s185 = sphi 0, %s171
      %s189 = sphi 0, %s189
      %s191 = sphi 0, %s189
      %s192 = sphi 0, %s191
      %s206 = sphi 0, %s192
      %s210 = sphi 0, %s210
      %s212 = sphi 0, %s210
      %s213 = sphi 0, %s212
      %s227 = sphi 0, %s213
      %s231 = sphi 0, %s231
      %s233 = sphi 0, %s231
      %s234 = sphi 0, %s233
      %s248 = sphi 0, %s234
      %s252 = sphi 0, %s252
      %s254 = sphi 0, %s252
      %s255 = sphi 0, %s254
      %s269 = sphi 0, %s255
      %s273 = sphi 0, %s273
      %s275 = sphi 0, %s273
      %s276 = sphi 0, %s275
      %s290 = sphi 0, %s276
      %s294 = sphi 0, %s294
      %s296 = sphi 0, %s294
      %s297 = sphi 0, %s296
      %s311 = sphi 0, %s297
      %s315 = sphi 0, %s315
      %s317 = sphi 0, %s315
      %s318 = sphi 0, %s317
      %s332 = sphi 0, %s318
      %s338 = sphi 0, %s340
      %s341 = sphi 0, %s338
      %s342 = sphi 0, %s341
      %s358 = sphi 0, %s342
    $region4: #{tpu_custom_call.1} parent=1 // loop_header_branch
      %27 = sbr.rel (%p25) target = $region8
    $region5: #{tpu_custom_call.1} parent=1 // loop_body
      %s29 = ssub.s32 %s24, 1
      %s30 = ssub.s32 %s24, 2
      %s31 = sadd.s32 %s24, 1
      %s32 = ssub.s32 %s24, %s31
      %p33 = scmp.eq.s32.totalorder %s32, 0
      %s35 = sadd.s32 %s34, 1
      %s36 = scalar_select %p33, %s34, %s35
      %p39 = pneg %p33
      %p40 = scmp.eq.s32.totalorder %s24, 1
      %p41 = por %p39, %p40
      %p42 = scmp.ne.s32.totalorder %s34, %s37
      %p43 = scmp.eq.s32.totalorder %s24, 0
      %p44 = por %p42, %p43
      %p45 = scmp.ne.s32.totalorder %s34, %s37
      %p46 = scmp.eq.s32.totalorder %s29, 1
      %p47 = por %p45, %p46
      %p48 = scmp.ne.s32.totalorder %s37, %s38
      %p49 = scmp.eq.s32.totalorder %s29, 0
      %p50 = por %p48, %p49
      %p51 = scmp.ne.s32.totalorder %s37, %s38
      %p52 = scmp.eq.s32.totalorder %s30, 1
      %p53 = por %p51, %p52
      %p55 = scmp.ne.s32.totalorder %s38, %s54
      %p56 = scmp.eq.s32.totalorder %s30, 0
      %p57 = por %p55, %p56
      %s58 = ssub.s32 %s24, %s31
      %p59 = scmp.eq.s32.totalorder %s58, 0
      %s61 = sadd.s32 %s60, 1
      %s62 = scalar_select %p59, %s60, %s61
      %p65 = pneg %p59
      %p66 = scmp.eq.s32.totalorder %s24, 1
      %p67 = por %p65, %p66
      %p68 = scmp.ne.s32.totalorder %s60, %s63
      %p69 = scmp.eq.s32.totalorder %s24, 0
      %p70 = por %p68, %p69
      %p71 = scmp.ne.s32.totalorder %s60, %s63
      %p72 = scmp.eq.s32.totalorder %s29, 1
      %p73 = por %p71, %p72
      %p74 = scmp.ne.s32.totalorder %s63, %s64
      %p75 = scmp.eq.s32.totalorder %s29, 0
      %p76 = por %p74, %p75
      %p77 = scmp.ne.s32.totalorder %s63, %s64
      %p78 = scmp.eq.s32.totalorder %s30, 1
      %p79 = por %p77, %p78
      %p81 = scmp.ne.s32.totalorder %s64, %s80
      %p82 = scmp.eq.s32.totalorder %s30, 0
      %p83 = por %p81, %p82
      %s85 = sadd.s32 %s84, 1
      %p88 = scmp.eq.s32.totalorder %s24, 1
      %p89 = scmp.ne.s32.totalorder %s84, %s86
      %p90 = scmp.eq.s32.totalorder %s24, 0
      %p91 = por %p89, %p90
      %p92 = scmp.ne.s32.totalorder %s84, %s86
      %p93 = scmp.eq.s32.totalorder %s29, 1
      %p94 = por %p92, %p93
      %p95 = scmp.ne.s32.totalorder %s86, %s87
      %p96 = scmp.eq.s32.totalorder %s29, 0
      %p97 = por %p95, %p96
      %p98 = scmp.ne.s32.totalorder %s86, %s87
      %p99 = scmp.eq.s32.totalorder %s30, 1
      %p100 = por %p98, %p99
      %p102 = scmp.ne.s32.totalorder %s87, %s101
      %p103 = scmp.eq.s32.totalorder %s30, 0
      %p104 = por %p102, %p103
      %s106 = sadd.s32 %s105, 1
      %p109 = scmp.eq.s32.totalorder %s24, 1
      %p110 = scmp.ne.s32.totalorder %s105, %s107
      %p111 = scmp.eq.s32.totalorder %s24, 0
      %p112 = por %p110, %p111
      %p113 = scmp.ne.s32.totalorder %s105, %s107
      %p114 = scmp.eq.s32.totalorder %s29, 1
      %p115 = por %p113, %p114
      %p116 = scmp.ne.s32.totalorder %s107, %s108
      %p117 = scmp.eq.s32.totalorder %s29, 0
      %p118 = por %p116, %p117
      %p119 = scmp.ne.s32.totalorder %s107, %s108
      %p120 = scmp.eq.s32.totalorder %s30, 1
      %p121 = por %p119, %p120
      %p123 = scmp.ne.s32.totalorder %s108, %s122
      %p124 = scmp.eq.s32.totalorder %s30, 0
      %p125 = por %p123, %p124
      %s127 = sadd.s32 %s126, 1
      %p130 = scmp.eq.s32.totalorder %s24, 1
      %p131 = scmp.ne.s32.totalorder %s126, %s128
      %p132 = scmp.eq.s32.totalorder %s24, 0
      %p133 = por %p131, %p132
      %p134 = scmp.ne.s32.totalorder %s126, %s128
      %p135 = scmp.eq.s32.totalorder %s29, 1
      %p136 = por %p134, %p135
      %p137 = scmp.ne.s32.totalorder %s128, %s129
      %p138 = scmp.eq.s32.totalorder %s29, 0
      %p139 = por %p137, %p138
      %p140 = scmp.ne.s32.totalorder %s128, %s129
      %p141 = scmp.eq.s32.totalorder %s30, 1
      %p142 = por %p140, %p141
      %p144 = scmp.ne.s32.totalorder %s129, %s143
      %p145 = scmp.eq.s32.totalorder %s30, 0
      %p146 = por %p144, %p145
      %s148 = sadd.s32 %s147, 1
      %p151 = scmp.eq.s32.totalorder %s24, 1
      %p152 = scmp.ne.s32.totalorder %s147, %s149
      %p153 = scmp.eq.s32.totalorder %s24, 0
      %p154 = por %p152, %p153
      %p155 = scmp.ne.s32.totalorder %s147, %s149
      %p156 = scmp.eq.s32.totalorder %s29, 1
      %p157 = por %p155, %p156
      %p158 = scmp.ne.s32.totalorder %s149, %s150
      %p159 = scmp.eq.s32.totalorder %s29, 0
      %p160 = por %p158, %p159
      %p161 = scmp.ne.s32.totalorder %s149, %s150
      %p162 = scmp.eq.s32.totalorder %s30, 1
      %p163 = por %p161, %p162
      %p165 = scmp.ne.s32.totalorder %s150, %s164
      %p166 = scmp.eq.s32.totalorder %s30, 0
      %p167 = por %p165, %p166
      %s169 = sadd.s32 %s168, 1
      %p172 = scmp.eq.s32.totalorder %s24, 1
      %p173 = scmp.ne.s32.totalorder %s168, %s170
      %p174 = scmp.eq.s32.totalorder %s24, 0
      %p175 = por %p173, %p174
      %p176 = scmp.ne.s32.totalorder %s168, %s170
      %p177 = scmp.eq.s32.totalorder %s29, 1
      %p178 = por %p176, %p177
      %p179 = scmp.ne.s32.totalorder %s170, %s171
      %p180 = scmp.eq.s32.totalorder %s29, 0
      %p181 = por %p179, %p180
      %p182 = scmp.ne.s32.totalorder %s170, %s171
      %p183 = scmp.eq.s32.totalorder %s30, 1
      %p184 = por %p182, %p183
      %p186 = scmp.ne.s32.totalorder %s171, %s185
      %p187 = scmp.eq.s32.totalorder %s30, 0
      %p188 = por %p186, %p187
      %s190 = sadd.s32 %s189, 1
      %p193 = scmp.eq.s32.totalorder %s24, 1
      %p194 = scmp.ne.s32.totalorder %s189, %s191
      %p195 = scmp.eq.s32.totalorder %s24, 0
      %p196 = por %p194, %p195
      %p197 = scmp.ne.s32.totalorder %s189, %s191
      %p198 = scmp.eq.s32.totalorder %s29, 1
      %p199 = por %p197, %p198
      %p200 = scmp.ne.s32.totalorder %s191, %s192
      %p201 = scmp.eq.s32.totalorder %s29, 0
      %p202 = por %p200, %p201
      %p203 = scmp.ne.s32.totalorder %s191, %s192
      %p204 = scmp.eq.s32.totalorder %s30, 1
      %p205 = por %p203, %p204
      %p207 = scmp.ne.s32.totalorder %s192, %s206
      %p208 = scmp.eq.s32.totalorder %s30, 0
      %p209 = por %p207, %p208
      %s211 = sadd.s32 %s210, 1
      %p214 = scmp.eq.s32.totalorder %s24, 1
      %p215 = scmp.ne.s32.totalorder %s210, %s212
      %p216 = scmp.eq.s32.totalorder %s24, 0
      %p217 = por %p215, %p216
      %p218 = scmp.ne.s32.totalorder %s210, %s212
      %p219 = scmp.eq.s32.totalorder %s29, 1
      %p220 = por %p218, %p219
      %p221 = scmp.ne.s32.totalorder %s212, %s213
      %p222 = scmp.eq.s32.totalorder %s29, 0
      %p223 = por %p221, %p222
      %p224 = scmp.ne.s32.totalorder %s212, %s213
      %p225 = scmp.eq.s32.totalorder %s30, 1
      %p226 = por %p224, %p225
      %p228 = scmp.ne.s32.totalorder %s213, %s227
      %p229 = scmp.eq.s32.totalorder %s30, 0
      %p230 = por %p228, %p229
      %s232 = sadd.s32 %s231, 1
      %p235 = scmp.eq.s32.totalorder %s24, 1
      %p236 = scmp.ne.s32.totalorder %s231, %s233
      %p237 = scmp.eq.s32.totalorder %s24, 0
      %p238 = por %p236, %p237
      %p239 = scmp.ne.s32.totalorder %s231, %s233
      %p240 = scmp.eq.s32.totalorder %s29, 1
      %p241 = por %p239, %p240
      %p242 = scmp.ne.s32.totalorder %s233, %s234
      %p243 = scmp.eq.s32.totalorder %s29, 0
      %p244 = por %p242, %p243
      %p245 = scmp.ne.s32.totalorder %s233, %s234
      %p246 = scmp.eq.s32.totalorder %s30, 1
      %p247 = por %p245, %p246
      %p249 = scmp.ne.s32.totalorder %s234, %s248
      %p250 = scmp.eq.s32.totalorder %s30, 0
      %p251 = por %p249, %p250
      %s253 = sadd.s32 %s252, 1
      %p256 = scmp.eq.s32.totalorder %s24, 1
      %p257 = scmp.ne.s32.totalorder %s252, %s254
      %p258 = scmp.eq.s32.totalorder %s24, 0
      %p259 = por %p257, %p258
      %p260 = scmp.ne.s32.totalorder %s252, %s254
      %p261 = scmp.eq.s32.totalorder %s29, 1
      %p262 = por %p260, %p261
      %p263 = scmp.ne.s32.totalorder %s254, %s255
      %p264 = scmp.eq.s32.totalorder %s29, 0
      %p265 = por %p263, %p264
      %p266 = scmp.ne.s32.totalorder %s254, %s255
      %p267 = scmp.eq.s32.totalorder %s30, 1
      %p268 = por %p266, %p267
      %p270 = scmp.ne.s32.totalorder %s255, %s269
      %p271 = scmp.eq.s32.totalorder %s30, 0
      %p272 = por %p270, %p271
      %s274 = sadd.s32 %s273, 1
      %p277 = scmp.eq.s32.totalorder %s24, 1
      %p278 = scmp.ne.s32.totalorder %s273, %s275
      %p279 = scmp.eq.s32.totalorder %s24, 0
      %p280 = por %p278, %p279
      %p281 = scmp.ne.s32.totalorder %s273, %s275
      %p282 = scmp.eq.s32.totalorder %s29, 1
      %p283 = por %p281, %p282
      %p284 = scmp.ne.s32.totalorder %s275, %s276
      %p285 = scmp.eq.s32.totalorder %s29, 0
      %p286 = por %p284, %p285
      %p287 = scmp.ne.s32.totalorder %s275, %s276
      %p288 = scmp.eq.s32.totalorder %s30, 1
      %p289 = por %p287, %p288
      %p291 = scmp.ne.s32.totalorder %s276, %s290
      %p292 = scmp.eq.s32.totalorder %s30, 0
      %p293 = por %p291, %p292
      %s295 = sadd.s32 %s294, 1
      %p298 = scmp.eq.s32.totalorder %s24, 1
      %p299 = scmp.ne.s32.totalorder %s294, %s296
      %p300 = scmp.eq.s32.totalorder %s24, 0
      %p301 = por %p299, %p300
      %p302 = scmp.ne.s32.totalorder %s294, %s296
      %p303 = scmp.eq.s32.totalorder %s29, 1
      %p304 = por %p302, %p303
      %p305 = scmp.ne.s32.totalorder %s296, %s297
      %p306 = scmp.eq.s32.totalorder %s29, 0
      %p307 = por %p305, %p306
      %p308 = scmp.ne.s32.totalorder %s296, %s297
      %p309 = scmp.eq.s32.totalorder %s30, 1
      %p310 = por %p308, %p309
      %p312 = scmp.ne.s32.totalorder %s297, %s311
      %p313 = scmp.eq.s32.totalorder %s30, 0
      %p314 = por %p312, %p313
      %s316 = sadd.s32 %s315, 1
      %p319 = scmp.eq.s32.totalorder %s24, 1
      %p320 = scmp.ne.s32.totalorder %s315, %s317
      %p321 = scmp.eq.s32.totalorder %s24, 0
      %p322 = por %p320, %p321
      %p323 = scmp.ne.s32.totalorder %s315, %s317
      %p324 = scmp.eq.s32.totalorder %s29, 1
      %p325 = por %p323, %p324
      %p326 = scmp.ne.s32.totalorder %s317, %s318
      %p327 = scmp.eq.s32.totalorder %s29, 0
      %p328 = por %p326, %p327
      %p329 = scmp.ne.s32.totalorder %s317, %s318
      %p330 = scmp.eq.s32.totalorder %s30, 1
      %p331 = por %p329, %p330
      %p333 = scmp.ne.s32.totalorder %s318, %s332
      %p334 = scmp.eq.s32.totalorder %s30, 0
      %p335 = por %p333, %p334
      %s336 = ssub.s32 %s24, %s31
      %p337 = scmp.eq.s32.totalorder %s336, 0
      %s339 = sadd.s32 %s338, 1
      %s340 = scalar_select %p337, %s338, %s339
      %p343 = pneg %p337
      %p344 = scmp.eq.s32.totalorder %s24, 1
      %p345 = por %p343, %p344
      %p346 = scmp.ne.s32.totalorder %s338, %s341
      %p347 = scmp.eq.s32.totalorder %s24, 0
      %p348 = por %p346, %p347
      %p349 = scmp.ne.s32.totalorder %s338, %s341
      %p350 = scmp.eq.s32.totalorder %s29, 1
      %p351 = por %p349, %p350
      %p352 = scmp.ne.s32.totalorder %s341, %s342
      %p353 = scmp.eq.s32.totalorder %s29, 0
      %p354 = por %p352, %p353
      %p355 = scmp.ne.s32.totalorder %s341, %s342
      %p356 = scmp.eq.s32.totalorder %s30, 1
      %p357 = por %p355, %p356
      %p359 = scmp.ne.s32.totalorder %s342, %s358
      %p360 = scmp.eq.s32.totalorder %s30, 0
      %p361 = por %p359, %p360
      %p362 = scmp.le.s32.totalorder 1, %s24
      %p363 = scmp.lt.s32.totalorder %s24, 3
      %p364 = pnand %p362, %p363
      %p365 = pneg %p364
      // Predicated region
      $region9: #{tpu_custom_call.1} parent=5 // pred_check
        _
      $region10: #{tpu_custom_call.1} parent=5 // pred_check_branch
        %367 = sbr.rel (%p364) target = $region12
      $region11: #{tpu_custom_call.1} parent=5 // pred_region
        %s368 = ssub.s32 %s24, 1
        // Predicated region
        $region13: #{tpu_custom_call.1} parent=11 // pred_check
          %p369 = pneg %p97
        $region14: #{tpu_custom_call.1} parent=11 // pred_check_branch
          %371 = sbr.rel (%p369) target = $region16
        $region15: #{tpu_custom_call.1} parent=11 // pred_region
          _
        $region16: #{tpu_custom_call.1} parent=11 // pred_fallthru
          _
        // Predicated region
        $region17: #{tpu_custom_call.1} parent=11 // pred_check
          %p372 = pneg %p118
        $region18: #{tpu_custom_call.1} parent=11 // pred_check_branch
          %374 = sbr.rel (%p372) target = $region20
        $region19: #{tpu_custom_call.1} parent=11 // pred_region
          _
        $region20: #{tpu_custom_call.1} parent=11 // pred_fallthru
          _
        // Predicated region
        $region21: #{tpu_custom_call.1} parent=11 // pred_check
          %p375 = pneg %p139
        $region22: #{tpu_custom_call.1} parent=11 // pred_check_branch
          %377 = sbr.rel (%p375) target = $region24
        $region23: #{tpu_custom_call.1} parent=11 // pred_region
          _
        $region24: #{tpu_custom_call.1} parent=11 // pred_fallthru
          _
        // Predicated region
        $region25: #{tpu_custom_call.1} parent=11 // pred_check
          %p378 = pneg %p160
        $region26: #{tpu_custom_call.1} parent=11 // pred_check_branch
          %380 = sbr.rel (%p378) target = $region28
        $region27: #{tpu_custom_call.1} parent=11 // pred_region
          _
        $region28: #{tpu_custom_call.1} parent=11 // pred_fallthru
          _
        // Predicated region
        $region29: #{tpu_custom_call.1} parent=11 // pred_check
          %p381 = pneg %p181
        $region30: #{tpu_custom_call.1} parent=11 // pred_check_branch
          %383 = sbr.rel (%p381) target = $region32
        $region31: #{tpu_custom_call.1} parent=11 // pred_region
          _
        $region32: #{tpu_custom_call.1} parent=11 // pred_fallthru
          _
        // Predicated region
        $region33: #{tpu_custom_call.1} parent=11 // pred_check
          %p384 = pneg %p202
        $region34: #{tpu_custom_call.1} parent=11 // pred_check_branch
          %386 = sbr.rel (%p384) target = $region36
        $region35: #{tpu_custom_call.1} parent=11 // pred_region
          _
        $region36: #{tpu_custom_call.1} parent=11 // pred_fallthru
          _
        // Predicated region
        $region37: #{tpu_custom_call.1} parent=11 // pred_check
          %p387 = pneg %p223
        $region38: #{tpu_custom_call.1} parent=11 // pred_check_branch
          %389 = sbr.rel (%p387) target = $region40
        $region39: #{tpu_custom_call.1} parent=11 // pred_region
          %s391 = ssub.s32 256, 256
          %392 = vsyncadd [#allocation3], %s391
          %s393 = sshll.u32 [#allocation2], 4
          %s394 = int_to_ptr.vmem [resolvable:$true] %s393
          %399 = dma.hbm_to_vmem [thread:$0]  %s8, 256, %s394, [#allocation3], 64, 64, 4
        $region40: #{tpu_custom_call.1} parent=11 // pred_fallthru
          _
        // Predicated region
        $region41: #{tpu_custom_call.1} parent=11 // pred_check
          %p400 = pneg %p244
        $region42: #{tpu_custom_call.1} parent=11 // pred_check_branch
          %402 = sbr.rel (%p400) target = $region44
        $region43: #{tpu_custom_call.1} parent=11 // pred_region
          _
        $region44: #{tpu_custom_call.1} parent=11 // pred_fallthru
          _
        // Predicated region
        $region45: #{tpu_custom_call.1} parent=11 // pred_check
          %p403 = pneg %p265
        $region46: #{tpu_custom_call.1} parent=11 // pred_check_branch
          %405 = sbr.rel (%p403) target = $region48
        $region47: #{tpu_custom_call.1} parent=11 // pred_region
          _
        $region48: #{tpu_custom_call.1} parent=11 // pred_fallthru
          _
        // Predicated region
        $region49: #{tpu_custom_call.1} parent=11 // pred_check
          %p406 = pneg %p286
        $region50: #{tpu_custom_call.1} parent=11 // pred_check_branch
          %408 = sbr.rel (%p406) target = $region52
        $region51: #{tpu_custom_call.1} parent=11 // pred_region
          _
        $region52: #{tpu_custom_call.1} parent=11 // pred_fallthru
          _
        // Predicated region
        $region53: #{tpu_custom_call.1} parent=11 // pred_check
          %p409 = pneg %p307
        $region54: #{tpu_custom_call.1} parent=11 // pred_check_branch
          %411 = sbr.rel (%p409) target = $region56
        $region55: #{tpu_custom_call.1} parent=11 // pred_region
          _
        $region56: #{tpu_custom_call.1} parent=11 // pred_fallthru
          _
        // Predicated region
        $region57: #{tpu_custom_call.1} parent=11 // pred_check
          %p412 = pneg %p328
        $region58: #{tpu_custom_call.1} parent=11 // pred_check_branch
          %414 = sbr.rel (%p412) target = $region60
        $region59: #{tpu_custom_call.1} parent=11 // pred_region
          _
        $region60: #{tpu_custom_call.1} parent=11 // pred_fallthru
          _
      $region12: #{tpu_custom_call.1} parent=5 // pred_fallthru
        _
      %p415 = scmp.lt.s32.totalorder %s24, 2
      // Predicated region
      $region61: #{tpu_custom_call.1} parent=5 // pred_check
        %p416 = pneg %p415
      $region62: #{tpu_custom_call.1} parent=5 // pred_check_branch
        %418 = sbr.rel (%p416) target = $region64
      $region63: #{tpu_custom_call.1} parent=5 // pred_region
        // Predicated region
        $region65: #{tpu_custom_call.1} parent=63 // pred_check
          %p419 = pneg %p44
        $region66: #{tpu_custom_call.1} parent=63 // pred_check_branch
          %421 = sbr.rel (%p419) target = $region68
        $region67: #{tpu_custom_call.1} parent=63 // pred_region
          %p422 = scmp.lt.s32.totalorder %s24, 1
          %s423 = scalar_select %p422, %s24, 1
          %s424 = smul.addr %s423, 8
          %s425 = scalar_lea.vmem %s0, %s424
        $region68: #{tpu_custom_call.1} parent=63 // pred_fallthru
          _
        // Predicated region
        $region69: #{tpu_custom_call.1} parent=63 // pred_check
          %p426 = pneg %p70
        $region70: #{tpu_custom_call.1} parent=63 // pred_check_branch
          %428 = sbr.rel (%p426) target = $region72
        $region71: #{tpu_custom_call.1} parent=63 // pred_region
          %p429 = scmp.lt.s32.totalorder %s24, 1
          %s430 = scalar_select %p429, %s24, 1
          %s431 = scalar_lea.vmem %s1, %s430
        $region72: #{tpu_custom_call.1} parent=63 // pred_fallthru
          _
      $region64: #{tpu_custom_call.1} parent=5 // pred_fallthru
        _
      %p432 = scmp.le.s32.totalorder 1, %s24
      %p433 = scmp.lt.s32.totalorder %s24, 3
      %p434 = pnand %p432, %p433
      %p435 = pneg %p434
      // Predicated region
      $region73: #{tpu_custom_call.1} parent=5 // pred_check
        _
      $region74: #{tpu_custom_call.1} parent=5 // pred_check_branch
        %437 = sbr.rel (%p434) target = $region76
      $region75: #{tpu_custom_call.1} parent=5 // pred_region
        %s438 = ssub.s32 %s24, 1
        // Predicated region
        $region77: #{tpu_custom_call.1} parent=75 // pred_check
          %p439 = pneg %p223
        $region78: #{tpu_custom_call.1} parent=75 // pred_check_branch
          %441 = sbr.rel (%p439) target = $region80
        $region79: #{tpu_custom_call.1} parent=75 // pred_region
          %442 = dma.done [#allocation3], 256
        $region80: #{tpu_custom_call.1} parent=75 // pred_fallthru
          _
        %p443 = scmp.lt.s32.totalorder %s29, 1
        %s444 = scalar_select %p443, %s29, 1
        %s445 = smul.addr %s444, 8
        %s446 = scalar_lea.vmem %s0, %s445
        %p447 = pneg %p50
        %p448 = pneg %p47
        %p449 = scmp.lt.s32.totalorder %s29, 1
        %s450 = scalar_select %p449, %s29, 1
        %s451 = scalar_lea.vmem %s1, %s450
        %p452 = pneg %p76
        %p453 = pneg %p73
        %p454 = pneg %p97
        %p455 = pneg %p94
        %p456 = pneg %p118
        %p457 = pneg %p115
        %p458 = pneg %p139
        %p459 = pneg %p136
        %p460 = pneg %p160
        %p461 = pneg %p157
        %p462 = pneg %p181
        %p463 = pneg %p178
        %p464 = pneg %p202
        %p465 = pneg %p199
        %p466 = pneg %p223
        %p467 = pneg %p220
        %p468 = pneg %p244
        %p469 = pneg %p241
        %p470 = pneg %p265
        %p471 = pneg %p262
        %p472 = pneg %p286
        %p473 = pneg %p283
        %p474 = pneg %p307
        %p475 = pneg %p304
        %p476 = pneg %p328
        %p477 = pneg %p325
        %p478 = pneg %p354
        %p479 = pneg %p351
        %s480 = sand.u32 %s341, 1
        %s481 = scalar_lea.sflag [#allocation4], %s480
        %s482 = sand.u32 %s341, 1
        %s483 = smul.addr %s482, 8
        %s484 = scalar_lea.vmem [#allocation5], %s483
        %p485 = scmp.lt.s32.totalorder %s29, 1
        %s486 = scalar_select %p485, %s29, 1
        %s487 = smul.addr %s486, 8
        %s488 = scalar_lea.vmem %s0, %s487
        %p489 = scmp.lt.s32.totalorder %s29, 1
        %s490 = scalar_select %p489, %s29, 1
        %s491 = scalar_lea.vmem %s1, %s490
        %v493 = vld [vmem:[%s488] sm:$0xff]
        %v494 = vld [vmem:[%s491] sm:$0x1]
        %v495 = vpack.c.bf16 %v493, %v493
        %v496 = vld [vmem:[%s2] sm:$0xf]
        %v497 = vld [vmem:[%s2 + $0x4] sm:$0xf]
        %v498 = vld [vmem:[%s2 + $0x8] sm:$0xf]
        %v499 = vld [vmem:[%s2 + $0xc] sm:$0xf]
        %v500 = vld [vmem:[%s3] sm:$0x1]
        %v502 = vlaneseq
        %v503 = vshrl.u32 %v502, 7
        %v504 = vsub.s32 0, %v503
        %v505 = vrot.slane %v500, %v504
        %v511 = vunpack.c.l.b16 %v496
        %v512 = vunpack.c.l.b16 %v497
        %v513 = vunpack.c.l.b16 %v498
        %v514 = vunpack.c.l.b16 %v499
        %v515 = vpack.c.b16 %v512, %v511
        %v516 = vpack.c.b16 %v514, %v513
        %vm519 = vcmask 261120
        %v521 = vsel %vm519, %v495, 0
        %523 = vmatprep.subr.bf16.mxu0 0
        %524 = vmatpush1.bf16.msra.mxu0 %v515
        %525 = vmatprep.subr.bf16.mxu0 0
        %526 = vmatpush1.bf16.msra.mxu0 %v516
        %527 = vmatprep.subr.bf16.mxu0 0
        %528 = vmatpush1.bf16.msra.mxu0 0
        %529 = vmatprep.subr.bf16.mxu0 0
        %530 = vmatpush1.bf16.msra.mxu0 0
        %531 = vmatprep.subr.bf16.mxu0 0
        %532 = vmatpush1.bf16.msra.mxu0 0
        %533 = vmatprep.subr.bf16.mxu0 0
        %534 = vmatpush1.bf16.msra.mxu0 0
        %535 = vmatprep.subr.bf16.mxu0 0
        %536 = vmatpush1.bf16.msra.mxu0 0
        %537 = vmatprep.subr.bf16.mxu0 0
        %538 = vmatpush1.bf16.msra.mxu0 0
        %539 = vmatprep.subr.bf16.mxu0 0
        %540 = vmatpush1.bf16.msra.mxu0 0
        %541 = vmatprep.subr.bf16.mxu0 0
        %542 = vmatpush1.bf16.msra.mxu0 0
        %543 = vmatprep.subr.bf16.mxu0 0
        %544 = vmatpush1.bf16.msra.mxu0 0
        %545 = vmatprep.subr.bf16.mxu0 0
        %546 = vmatpush1.bf16.msra.mxu0 0
        %547 = vmatprep.subr.bf16.mxu0 0
        %548 = vmatpush1.bf16.msra.mxu0 0
        %549 = vmatprep.subr.bf16.mxu0 0
        %550 = vmatpush1.bf16.msra.mxu0 0
        %551 = vmatprep.subr.bf16.mxu0 0
        %552 = vmatpush1.bf16.msra.mxu0 0
        %553 = vmatprep.subr.bf16.mxu0 0
        %554 = vmatpush1.bf16.msra.mxu0 0
        %555 = vmatprep.mubr.bf16.mxu0 0
        %556 = vmatmul.mubr.bf16.gmra.mrb[0].mxu0 %v521
        %v557 = vpop.f32.mrb[0].mxu0
        %v558 = vadd.f32 %v505, %v557
        %v559 = vpop.f32.mrb[0].mxu0
        %v560 = vpop.f32.mrb[0].mxu0
        %v561 = vpop.f32.mrb[0].mxu0
        %562 = vdwg.mxu0
        %564 = vrot.lane.b32.xlu0 %v558, 120
        %v565 = vpop.permute.xlu0 %564
        %567 = vrot.lane.b32.xlu0 %v558, 112
        %v568 = vpop.permute.xlu0 %567
        %570 = vrot.lane.b32.xlu0 %v558, 104
        %v571 = vpop.permute.xlu0 %570
        %v573 = vpack.c.bf16 %v558, %v558
        %v574 = vpack.c.bf16 %v565, %v565
        %v575 = vpack.c.bf16 %v568, %v568
        %v576 = vpack.c.bf16 %v571, %v571
        %578 = vrot.lane.b32.xlu0 %v573, 96
        %v579 = vpop.permute.xlu0 %578
        %vm580 = vcmask 64512
        %v582 = vsel %vm580, %v573, 0
        %v585 = vsel %vm580, %v579, 0
        %587 = vmatprep.subr.bf16.mxu0 0
        %588 = vmatpush1.bf16.xpose.msra.mxu0 %v585
        %589 = vmatprep.subr.bf16.mxu0 0
        %590 = vmatpush1.bf16.xpose.msra.mxu0 0
        %591 = vmatprep.subr.bf16.mxu0 0
        %592 = vmatpush1.bf16.xpose.msra.mxu0 0
        %593 = vmatprep.subr.bf16.mxu0 0
        %594 = vmatpush1.bf16.xpose.msra.mxu0 0
        %595 = vmatprep.subr.bf16.mxu0 0
        %596 = vmatpush1.bf16.xpose.msra.mxu0 0
        %597 = vmatprep.subr.bf16.mxu0 0
        %598 = vmatpush1.bf16.xpose.msra.mxu0 0
        %599 = vmatprep.subr.bf16.mxu0 0
        %600 = vmatpush1.bf16.xpose.msra.mxu0 0
        %601 = vmatprep.subr.bf16.mxu0 0
        %602 = vmatpush1.bf16.xpose.msra.mxu0 0
        %603 = vmatprep.subr.bf16.mxu0 0
        %604 = vmatpush1.bf16.xpose.msra.mxu0 0
        %605 = vmatprep.subr.bf16.mxu0 0
        %606 = vmatpush1.bf16.xpose.msra.mxu0 0
        %607 = vmatprep.subr.bf16.mxu0 0
        %608 = vmatpush1.bf16.xpose.msra.mxu0 0
        %609 = vmatprep.subr.bf16.mxu0 0
        %610 = vmatpush1.bf16.xpose.msra.mxu0 0
        %611 = vmatprep.subr.bf16.mxu0 0
        %612 = vmatpush1.bf16.xpose.msra.mxu0 0
        %613 = vmatprep.subr.bf16.mxu0 0
        %614 = vmatpush1.bf16.xpose.msra.mxu0 0
        %615 = vmatprep.subr.bf16.mxu0 0
        %616 = vmatpush1.bf16.xpose.msra.mxu0 0
        %617 = vmatprep.subr.bf16.mxu0 0
        %618 = vmatpush1.bf16.xpose.msra.mxu0 0
        %619 = vmatprep.mubr.bf16.mxu0 0
        %620 = vmatmul.mubr.bf16.gmra.mrb[0].mxu0 %v582
        %v621 = vpop.f32.mrb[0].mxu0
        %v622 = vadd.f32 0.0, %v621
        %v623 = vpop.f32.mrb[0].mxu0
        %v624 = vpop.f32.mrb[0].mxu0
        %v625 = vpop.f32.mrb[0].mxu0
        %626 = vdwg.mxu0
        %628 = vrot.lane.b32.xlu0 %v574, 96
        %v629 = vpop.permute.xlu0 %628
        %v631 = vsel %vm580, %v574, 0
        %v634 = vsel %vm580, %v629, 0
        %636 = vmatprep.subr.bf16.mxu0 0
        %637 = vmatpush1.bf16.xpose.msra.mxu0 %v634
        %638 = vmatprep.subr.bf16.mxu0 0
        %639 = vmatpush1.bf16.xpose.msra.mxu0 0
        %640 = vmatprep.subr.bf16.mxu0 0
        %641 = vmatpush1.bf16.xpose.msra.mxu0 0
        %642 = vmatprep.subr.bf16.mxu0 0
        %643 = vmatpush1.bf16.xpose.msra.mxu0 0
        %644 = vmatprep.subr.bf16.mxu0 0
        %645 = vmatpush1.bf16.xpose.msra.mxu0 0
        %646 = vmatprep.subr.bf16.mxu0 0
        %647 = vmatpush1.bf16.xpose.msra.mxu0 0
        %648 = vmatprep.subr.bf16.mxu0 0
        %649 = vmatpush1.bf16.xpose.msra.mxu0 0
        %650 = vmatprep.subr.bf16.mxu0 0
        %651 = vmatpush1.bf16.xpose.msra.mxu0 0
        %652 = vmatprep.subr.bf16.mxu0 0
        %653 = vmatpush1.bf16.xpose.msra.mxu0 0
        %654 = vmatprep.subr.bf16.mxu0 0
        %655 = vmatpush1.bf16.xpose.msra.mxu0 0
        %656 = vmatprep.subr.bf16.mxu0 0
        %657 = vmatpush1.bf16.xpose.msra.mxu0 0
        %658 = vmatprep.subr.bf16.mxu0 0
        %659 = vmatpush1.bf16.xpose.msra.mxu0 0
        %660 = vmatprep.subr.bf16.mxu0 0
        %661 = vmatpush1.bf16.xpose.msra.mxu0 0
        %662 = vmatprep.subr.bf16.mxu0 0
        %663 = vmatpush1.bf16.xpose.msra.mxu0 0
        %664 = vmatprep.subr.bf16.mxu0 0
        %665 = vmatpush1.bf16.xpose.msra.mxu0 0
        %666 = vmatprep.subr.bf16.mxu0 0
        %667 = vmatpush1.bf16.xpose.msra.mxu0 0
        %668 = vmatprep.mubr.bf16.mxu0 0
        %669 = vmatmul.mubr.bf16.gmra.mrb[0].mxu0 %v631
        %v670 = vpop.f32.mrb[0].mxu0
        %v671 = vadd.f32 0.0, %v670
        %v672 = vpop.f32.mrb[0].mxu0
        %v673 = vpop.f32.mrb[0].mxu0
        %v674 = vpop.f32.mrb[0].mxu0
        %675 = vdwg.mxu0
        %677 = vrot.lane.b32.xlu0 %v575, 96
        %v678 = vpop.permute.xlu0 %677
        %v680 = vsel %vm580, %v575, 0
        %v683 = vsel %vm580, %v678, 0
        %685 = vmatprep.subr.bf16.mxu0 0
        %686 = vmatpush1.bf16.xpose.msra.mxu0 %v683
        %687 = vmatprep.subr.bf16.mxu0 0
        %688 = vmatpush1.bf16.xpose.msra.mxu0 0
        %689 = vmatprep.subr.bf16.mxu0 0
        %690 = vmatpush1.bf16.xpose.msra.mxu0 0
        %691 = vmatprep.subr.bf16.mxu0 0
        %692 = vmatpush1.bf16.xpose.msra.mxu0 0
        %693 = vmatprep.subr.bf16.mxu0 0
        %694 = vmatpush1.bf16.xpose.msra.mxu0 0
        %695 = vmatprep.subr.bf16.mxu0 0
        %696 = vmatpush1.bf16.xpose.msra.mxu0 0
        %697 = vmatprep.subr.bf16.mxu0 0
        %698 = vmatpush1.bf16.xpose.msra.mxu0 0
        %699 = vmatprep.subr.bf16.mxu0 0
        %700 = vmatpush1.bf16.xpose.msra.mxu0 0
        %701 = vmatprep.subr.bf16.mxu0 0
        %702 = vmatpush1.bf16.xpose.msra.mxu0 0
        %703 = vmatprep.subr.bf16.mxu0 0
        %704 = vmatpush1.bf16.xpose.msra.mxu0 0
        %705 = vmatprep.subr.bf16.mxu0 0
        %706 = vmatpush1.bf16.xpose.msra.mxu0 0
        %707 = vmatprep.subr.bf16.mxu0 0
        %708 = vmatpush1.bf16.xpose.msra.mxu0 0
        %709 = vmatprep.subr.bf16.mxu0 0
        %710 = vmatpush1.bf16.xpose.msra.mxu0 0
        %711 = vmatprep.subr.bf16.mxu0 0
        %712 = vmatpush1.bf16.xpose.msra.mxu0 0
        %713 = vmatprep.subr.bf16.mxu0 0
        %714 = vmatpush1.bf16.xpose.msra.mxu0 0
        %715 = vmatprep.subr.bf16.mxu0 0
        %716 = vmatpush1.bf16.xpose.msra.mxu0 0
        %717 = vmatprep.mubr.bf16.mxu0 0
        %718 = vmatmul.mubr.bf16.gmra.mrb[0].mxu0 %v680
        %v719 = vpop.f32.mrb[0].mxu0
        %v720 = vadd.f32 0.0, %v719
        %v721 = vpop.f32.mrb[0].mxu0
        %v722 = vpop.f32.mrb[0].mxu0
        %v723 = vpop.f32.mrb[0].mxu0
        %724 = vdwg.mxu0
        %726 = vrot.lane.b32.xlu0 %v576, 96
        %v727 = vpop.permute.xlu0 %726
        %v729 = vsel %vm580, %v576, 0
        %v732 = vsel %vm580, %v727, 0
        %734 = vmatprep.subr.bf16.mxu0 0
        %735 = vmatpush1.bf16.xpose.msra.mxu0 %v732
        %736 = vmatprep.subr.bf16.mxu0 0
        %737 = vmatpush1.bf16.xpose.msra.mxu0 0
        %738 = vmatprep.subr.bf16.mxu0 0
        %739 = vmatpush1.bf16.xpose.msra.mxu0 0
        %740 = vmatprep.subr.bf16.mxu0 0
        %741 = vmatpush1.bf16.xpose.msra.mxu0 0
        %742 = vmatprep.subr.bf16.mxu0 0
        %743 = vmatpush1.bf16.xpose.msra.mxu0 0
        %744 = vmatprep.subr.bf16.mxu0 0
        %745 = vmatpush1.bf16.xpose.msra.mxu0 0
        %746 = vmatprep.subr.bf16.mxu0 0
        %747 = vmatpush1.bf16.xpose.msra.mxu0 0
        %748 = vmatprep.subr.bf16.mxu0 0
        %749 = vmatpush1.bf16.xpose.msra.mxu0 0
        %750 = vmatprep.subr.bf16.mxu0 0
        %751 = vmatpush1.bf16.xpose.msra.mxu0 0
        %752 = vmatprep.subr.bf16.mxu0 0
        %753 = vmatpush1.bf16.xpose.msra.mxu0 0
        %754 = vmatprep.subr.bf16.mxu0 0
        %755 = vmatpush1.bf16.xpose.msra.mxu0 0
        %756 = vmatprep.subr.bf16.mxu0 0
        %757 = vmatpush1.bf16.xpose.msra.mxu0 0
        %758 = vmatprep.subr.bf16.mxu0 0
        %759 = vmatpush1.bf16.xpose.msra.mxu0 0
        %760 = vmatprep.subr.bf16.mxu0 0
        %761 = vmatpush1.bf16.xpose.msra.mxu0 0
        %762 = vmatprep.subr.bf16.mxu0 0
        %763 = vmatpush1.bf16.xpose.msra.mxu0 0
        %764 = vmatprep.subr.bf16.mxu0 0
        %765 = vmatpush1.bf16.xpose.msra.mxu0 0
        %766 = vmatprep.mubr.bf16.mxu0 0
        %767 = vmatmul.mubr.bf16.gmra.mrb[0].mxu0 %v729
        %v768 = vpop.f32.mrb[0].mxu0
        %v769 = vadd.f32 0.0, %v768
        %v770 = vpop.f32.mrb[0].mxu0
        %v771 = vpop.f32.mrb[0].mxu0
        %v772 = vpop.f32.mrb[0].mxu0
        %773 = vdwg.mxu0
        %v774 = vmul.f32 %v622, 0.35355338
        %v775 = vmul.f32 %v671, 0.35355338
        %v776 = vmul.f32 %v720, 0.35355338
        %v777 = vmul.f32 %v769, 0.35355338
        %v779 = vlaneseq
        %v780 = vshrl.u32 %v779, 7
        %v781 = vsub.s32 0, %v780
        %v782 = vrot.slane %v494, %v781
        %v784 = vadd.f32 %v774, %v782
        %v785 = vadd.f32 %v775, %v782
        %v786 = vadd.f32 %v776, %v782
        %v787 = vadd.f32 %v777, %v782
        %v788 = vsel %vm580, %v784, -inf
        %789 = vmax.xlane.f32.xlu0 %v788
        %v790 = vpop.xlane.xlu0 %789
        %v791 = vsel %vm580, %v785, -inf
        %792 = vmax.xlane.f32.xlu0 %v791
        %v793 = vpop.xlane.xlu0 %792
        %v794 = vsel %vm580, %v786, -inf
        %795 = vmax.xlane.f32.xlu0 %v794
        %v796 = vpop.xlane.xlu0 %795
        %v797 = vsel %vm580, %v787, -inf
        %798 = vmax.xlane.f32.xlu0 %v797
        %v799 = vpop.xlane.xlu0 %798
        %v800 = vsub.f32 %v784, %v790
        %v801 = vsub.f32 %v785, %v793
        %v802 = vsub.f32 %v786, %v796
        %v803 = vsub.f32 %v787, %v799
        %v804 = vmul.f32 %v800, 1.442695
        %v805 = vpow.pop %v804
        %v806 = vmul.f32 %v801, 1.442695
        %v807 = vpow.pop %v806
        %v808 = vmul.f32 %v802, 1.442695
        %v809 = vpow.pop %v808
        %v810 = vmul.f32 %v803, 1.442695
        %v811 = vpow.pop %v810
        %v812 = vsel %vm580, %v805, 0.0
        %813 = vadd.xlane.f32.xlu0 %v812
        %v814 = vpop.xlane.xlu0 %813
        %v815 = vsel %vm580, %v807, 0.0
        %816 = vadd.xlane.f32.xlu0 %v815
        %v817 = vpop.xlane.xlu0 %816
        %v818 = vsel %vm580, %v809, 0.0
        %819 = vadd.xlane.f32.xlu0 %v818
        %v820 = vpop.xlane.xlu0 %819
        %v821 = vsel %vm580, %v811, 0.0
        %822 = vadd.xlane.f32.xlu0 %v821
        %v823 = vpop.xlane.xlu0 %822
        %v824 = vrcp.pop %v814
        %v825 = vrcp.pop %v817
        %v826 = vrcp.pop %v820
        %v827 = vrcp.pop %v823
        %v828 = vmul.f32 %v805, %v824
        %v829 = vmul.f32 %v807, %v825
        %v830 = vmul.f32 %v809, %v826
        %v831 = vmul.f32 %v811, %v827
        %v832 = vpack.c.bf16 %v828, %v828
        %v833 = vpack.c.bf16 %v829, %v829
        %v834 = vpack.c.bf16 %v830, %v830
        %v835 = vpack.c.bf16 %v831, %v831
        %836 = vrot.lane.b32.xlu0 %v573, 64
        %v837 = vpop.permute.xlu0 %836
        %v839 = vsel %vm580, %v832, 0
        %vm841 = vcmask 1043456
        %v843 = vsel %vm841, %v837, 0
        %845 = vmatprep.subr.bf16.mxu0 0
        %846 = vmatpush1.bf16.msra.mxu0 %v843
        %847 = vmatprep.subr.bf16.mxu0 0
        %848 = vmatpush1.bf16.msra.mxu0 0
        %849 = vmatprep.subr.bf16.mxu0 0
        %850 = vmatpush1.bf16.msra.mxu0 0
        %851 = vmatprep.subr.bf16.mxu0 0
        %852 = vmatpush1.bf16.msra.mxu0 0
        %853 = vmatprep.subr.bf16.mxu0 0
        %854 = vmatpush1.bf16.msra.mxu0 0
        %855 = vmatprep.subr.bf16.mxu0 0
        %856 = vmatpush1.bf16.msra.mxu0 0
        %857 = vmatprep.subr.bf16.mxu0 0
        %858 = vmatpush1.bf16.msra.mxu0 0
        %859 = vmatprep.subr.bf16.mxu0 0
        %860 = vmatpush1.bf16.msra.mxu0 0
        %861 = vmatprep.subr.bf16.mxu0 0
        %862 = vmatpush1.bf16.msra.mxu0 0
        %863 = vmatprep.subr.bf16.mxu0 0
        %864 = vmatpush1.bf16.msra.mxu0 0
        %865 = vmatprep.subr.bf16.mxu0 0
        %866 = vmatpush1.bf16.msra.mxu0 0
        %867 = vmatprep.subr.bf16.mxu0 0
        %868 = vmatpush1.bf16.msra.mxu0 0
        %869 = vmatprep.subr.bf16.mxu0 0
        %870 = vmatpush1.bf16.msra.mxu0 0
        %871 = vmatprep.subr.bf16.mxu0 0
        %872 = vmatpush1.bf16.msra.mxu0 0
        %873 = vmatprep.subr.bf16.mxu0 0
        %874 = vmatpush1.bf16.msra.mxu0 0
        %875 = vmatprep.subr.bf16.mxu0 0
        %876 = vmatpush1.bf16.msra.mxu0 0
        %877 = vmatprep.mubr.bf16.mxu0 0
        %878 = vmatmul.mubr.bf16.gmra.mrb[0].mxu0 %v839
        %v879 = vpop.f32.mrb[0].mxu0
        %v880 = vadd.f32 0.0, %v879
        %v881 = vpop.f32.mrb[0].mxu0
        %v882 = vpop.f32.mrb[0].mxu0
        %v883 = vpop.f32.mrb[0].mxu0
        %884 = vdwg.mxu0
        %885 = vrot.lane.b32.xlu0 %v574, 64
        %v886 = vpop.permute.xlu0 %885
        %v888 = vsel %vm580, %v833, 0
        %v891 = vsel %vm841, %v886, 0
        %893 = vmatprep.subr.bf16.mxu0 0
        %894 = vmatpush1.bf16.msra.mxu0 %v891
        %895 = vmatprep.subr.bf16.mxu0 0
        %896 = vmatpush1.bf16.msra.mxu0 0
        %897 = vmatprep.subr.bf16.mxu0 0
        %898 = vmatpush1.bf16.msra.mxu0 0
        %899 = vmatprep.subr.bf16.mxu0 0
        %900 = vmatpush1.bf16.msra.mxu0 0
        %901 = vmatprep.subr.bf16.mxu0 0
        %902 = vmatpush1.bf16.msra.mxu0 0
        %903 = vmatprep.subr.bf16.mxu0 0
        %904 = vmatpush1.bf16.msra.mxu0 0
        %905 = vmatprep.subr.bf16.mxu0 0
        %906 = vmatpush1.bf16.msra.mxu0 0
        %907 = vmatprep.subr.bf16.mxu0 0
        %908 = vmatpush1.bf16.msra.mxu0 0
        %909 = vmatprep.subr.bf16.mxu0 0
        %910 = vmatpush1.bf16.msra.mxu0 0
        %911 = vmatprep.subr.bf16.mxu0 0
        %912 = vmatpush1.bf16.msra.mxu0 0
        %913 = vmatprep.subr.bf16.mxu0 0
        %914 = vmatpush1.bf16.msra.mxu0 0
        %915 = vmatprep.subr.bf16.mxu0 0
        %916 = vmatpush1.bf16.msra.mxu0 0
        %917 = vmatprep.subr.bf16.mxu0 0
        %918 = vmatpush1.bf16.msra.mxu0 0
        %919 = vmatprep.subr.bf16.mxu0 0
        %920 = vmatpush1.bf16.msra.mxu0 0
        %921 = vmatprep.subr.bf16.mxu0 0
        %922 = vmatpush1.bf16.msra.mxu0 0
        %923 = vmatprep.subr.bf16.mxu0 0
        %924 = vmatpush1.bf16.msra.mxu0 0
        %925 = vmatprep.mubr.bf16.mxu0 0
        %926 = vmatmul.mubr.bf16.gmra.mrb[0].mxu0 %v888
        %v927 = vpop.f32.mrb[0].mxu0
        %v928 = vadd.f32 0.0, %v927
        %v929 = vpop.f32.mrb[0].mxu0
        %v930 = vpop.f32.mrb[0].mxu0
        %v931 = vpop.f32.mrb[0].mxu0
        %932 = vdwg.mxu0
        %933 = vrot.lane.b32.xlu0 %v575, 64
        %v934 = vpop.permute.xlu0 %933
        %v936 = vsel %vm580, %v834, 0
        %v939 = vsel %vm841, %v934, 0
        %941 = vmatprep.subr.bf16.mxu0 0
        %942 = vmatpush1.bf16.msra.mxu0 %v939
        %943 = vmatprep.subr.bf16.mxu0 0
        %944 = vmatpush1.bf16.msra.mxu0 0
        %945 = vmatprep.subr.bf16.mxu0 0
        %946 = vmatpush1.bf16.msra.mxu0 0
        %947 = vmatprep.subr.bf16.mxu0 0
        %948 = vmatpush1.bf16.msra.mxu0 0
        %949 = vmatprep.subr.bf16.mxu0 0
        %950 = vmatpush1.bf16.msra.mxu0 0
        %951 = vmatprep.subr.bf16.mxu0 0
        %952 = vmatpush1.bf16.msra.mxu0 0
        %953 = vmatprep.subr.bf16.mxu0 0
        %954 = vmatpush1.bf16.msra.mxu0 0
        %955 = vmatprep.subr.bf16.mxu0 0
        %956 = vmatpush1.bf16.msra.mxu0 0
        %957 = vmatprep.subr.bf16.mxu0 0
        %958 = vmatpush1.bf16.msra.mxu0 0
        %959 = vmatprep.subr.bf16.mxu0 0
        %960 = vmatpush1.bf16.msra.mxu0 0
        %961 = vmatprep.subr.bf16.mxu0 0
        %962 = vmatpush1.bf16.msra.mxu0 0
        %963 = vmatprep.subr.bf16.mxu0 0
        %964 = vmatpush1.bf16.msra.mxu0 0
        %965 = vmatprep.subr.bf16.mxu0 0
        %966 = vmatpush1.bf16.msra.mxu0 0
        %967 = vmatprep.subr.bf16.mxu0 0
        %968 = vmatpush1.bf16.msra.mxu0 0
        %969 = vmatprep.subr.bf16.mxu0 0
        %970 = vmatpush1.bf16.msra.mxu0 0
        %971 = vmatprep.subr.bf16.mxu0 0
        %972 = vmatpush1.bf16.msra.mxu0 0
        %973 = vmatprep.mubr.bf16.mxu0 0
        %974 = vmatmul.mubr.bf16.gmra.mrb[0].mxu0 %v936
        %v975 = vpop.f32.mrb[0].mxu0
        %v976 = vadd.f32 0.0, %v975
        %v977 = vpop.f32.mrb[0].mxu0
        %v978 = vpop.f32.mrb[0].mxu0
        %v979 = vpop.f32.mrb[0].mxu0
        %980 = vdwg.mxu0
        %981 = vrot.lane.b32.xlu0 %v576, 64
        %v982 = vpop.permute.xlu0 %981
        %v984 = vsel %vm580, %v835, 0
        %v987 = vsel %vm841, %v982, 0
        %989 = vmatprep.subr.bf16.mxu0 0
        %990 = vmatpush1.bf16.msra.mxu0 %v987
        %991 = vmatprep.subr.bf16.mxu0 0
        %992 = vmatpush1.bf16.msra.mxu0 0
        %993 = vmatprep.subr.bf16.mxu0 0
        %994 = vmatpush1.bf16.msra.mxu0 0
        %995 = vmatprep.subr.bf16.mxu0 0
        %996 = vmatpush1.bf16.msra.mxu0 0
        %997 = vmatprep.subr.bf16.mxu0 0
        %998 = vmatpush1.bf16.msra.mxu0 0
        %999 = vmatprep.subr.bf16.mxu0 0
        %1000 = vmatpush1.bf16.msra.mxu0 0
        %1001 = vmatprep.subr.bf16.mxu0 0
        %1002 = vmatpush1.bf16.msra.mxu0 0
        %1003 = vmatprep.subr.bf16.mxu0 0
        %1004 = vmatpush1.bf16.msra.mxu0 0
        %1005 = vmatprep.subr.bf16.mxu0 0
        %1006 = vmatpush1.bf16.msra.mxu0 0
        %1007 = vmatprep.subr.bf16.mxu0 0
        %1008 = vmatpush1.bf16.msra.mxu0 0
        %1009 = vmatprep.subr.bf16.mxu0 0
        %1010 = vmatpush1.bf16.msra.mxu0 0
        %1011 = vmatprep.subr.bf16.mxu0 0
        %1012 = vmatpush1.bf16.msra.mxu0 0
        %1013 = vmatprep.subr.bf16.mxu0 0
        %1014 = vmatpush1.bf16.msra.mxu0 0
        %1015 = vmatprep.subr.bf16.mxu0 0
        %1016 = vmatpush1.bf16.msra.mxu0 0
        %1017 = vmatprep.subr.bf16.mxu0 0
        %1018 = vmatpush1.bf16.msra.mxu0 0
        %1019 = vmatprep.subr.bf16.mxu0 0
        %1020 = vmatpush1.bf16.msra.mxu0 0
        %1021 = vmatprep.mubr.bf16.mxu0 0
        %1022 = vmatmul.mubr.bf16.gmra.mrb[0].mxu0 %v984
        %v1023 = vpop.f32.mrb[0].mxu0
        %v1024 = vadd.f32 0.0, %v1023
        %v1025 = vpop.f32.mrb[0].mxu0
        %v1026 = vpop.f32.mrb[0].mxu0
        %v1027 = vpop.f32.mrb[0].mxu0
        %1028 = vdwg.mxu0
        %v1029 = vld [vmem:[%s4] sm:$0xf]
        %v1030 = vld [vmem:[%s4 + $0x4] sm:$0xf]
        %v1031 = vld [vmem:[%s4 + $0x8] sm:$0xf]
        %v1032 = vld [vmem:[%s4 + $0xc] sm:$0xf]
        %v1033 = vpack.c.bf16 %v880, %v880
        %v1034 = vpack.c.bf16 %v928, %v928
        %v1035 = vpack.c.bf16 %v976, %v976
        %v1036 = vpack.c.bf16 %v1024, %v1024
        %v1038 = vsel %vm580, %v1034, 0
        %v1041 = vsel %vm841, %v1030, 0
        %1043 = vmatprep.subr.bf16.mxu0 0
        %1044 = vmatpush1.bf16.msra.mxu0 %v1041
        %1045 = vmatprep.subr.bf16.mxu0 0
        %1046 = vmatpush1.bf16.msra.mxu0 0
        %1047 = vmatprep.subr.bf16.mxu0 0
        %1048 = vmatpush1.bf16.msra.mxu0 0
        %1049 = vmatprep.subr.bf16.mxu0 0
        %1050 = vmatpush1.bf16.msra.mxu0 0
        %1051 = vmatprep.subr.bf16.mxu0 0
        %1052 = vmatpush1.bf16.msra.mxu0 0
        %1053 = vmatprep.subr.bf16.mxu0 0
        %1054 = vmatpush1.bf16.msra.mxu0 0
        %1055 = vmatprep.subr.bf16.mxu0 0
        %1056 = vmatpush1.bf16.msra.mxu0 0
        %1057 = vmatprep.subr.bf16.mxu0 0
        %1058 = vmatpush1.bf16.msra.mxu0 0
        %1059 = vmatprep.subr.bf16.mxu0 0
        %1060 = vmatpush1.bf16.msra.mxu0 0
        %1061 = vmatprep.subr.bf16.mxu0 0
        %1062 = vmatpush1.bf16.msra.mxu0 0
        %1063 = vmatprep.subr.bf16.mxu0 0
        %1064 = vmatpush1.bf16.msra.mxu0 0
        %1065 = vmatprep.subr.bf16.mxu0 0
        %1066 = vmatpush1.bf16.msra.mxu0 0
        %1067 = vmatprep.subr.bf16.mxu0 0
        %1068 = vmatpush1.bf16.msra.mxu0 0
        %1069 = vmatprep.subr.bf16.mxu0 0
        %1070 = vmatpush1.bf16.msra.mxu0 0
        %1071 = vmatprep.subr.bf16.mxu0 0
        %1072 = vmatpush1.bf16.msra.mxu0 0
        %1073 = vmatprep.subr.bf16.mxu0 0
        %1074 = vmatpush1.bf16.msra.mxu0 0
        %1075 = vmatprep.mubr.bf16.mxu0 0
        %1076 = vmatmul.mubr.bf16.gmra.mrb[0].mxu0 %v1038
        %v1077 = vpop.f32.mrb[0].mxu0
        %v1078 = vadd.f32 0.0, %v1077
        %v1079 = vpop.f32.mrb[0].mxu0
        %v1080 = vpop.f32.mrb[0].mxu0
        %v1081 = vpop.f32.mrb[0].mxu0
        %1082 = vdwg.mxu0
        %v1084 = vsel %vm580, %v1033, 0
        %v1087 = vsel %vm841, %v1029, 0
        %1089 = vmatprep.subr.bf16.mxu0 0
        %1090 = vmatpush1.bf16.msra.mxu0 %v1087
        %1091 = vmatprep.subr.bf16.mxu0 0
        %1092 = vmatpush1.bf16.msra.mxu0 0
        %1093 = vmatprep.subr.bf16.mxu0 0
        %1094 = vmatpush1.bf16.msra.mxu0 0
        %1095 = vmatprep.subr.bf16.mxu0 0
        %1096 = vmatpush1.bf16.msra.mxu0 0
        %1097 = vmatprep.subr.bf16.mxu0 0
        %1098 = vmatpush1.bf16.msra.mxu0 0
        %1099 = vmatprep.subr.bf16.mxu0 0
        %1100 = vmatpush1.bf16.msra.mxu0 0
        %1101 = vmatprep.subr.bf16.mxu0 0
        %1102 = vmatpush1.bf16.msra.mxu0 0
        %1103 = vmatprep.subr.bf16.mxu0 0
        %1104 = vmatpush1.bf16.msra.mxu0 0
        %1105 = vmatprep.subr.bf16.mxu0 0
        %1106 = vmatpush1.bf16.msra.mxu0 0
        %1107 = vmatprep.subr.bf16.mxu0 0
        %1108 = vmatpush1.bf16.msra.mxu0 0
        %1109 = vmatprep.subr.bf16.mxu0 0
        %1110 = vmatpush1.bf16.msra.mxu0 0
        %1111 = vmatprep.subr.bf16.mxu0 0
        %1112 = vmatpush1.bf16.msra.mxu0 0
        %1113 = vmatprep.subr.bf16.mxu0 0
        %1114 = vmatpush1.bf16.msra.mxu0 0
        %1115 = vmatprep.subr.bf16.mxu0 0
        %1116 = vmatpush1.bf16.msra.mxu0 0
        %1117 = vmatprep.subr.bf16.mxu0 0
        %1118 = vmatpush1.bf16.msra.mxu0 0
        %1119 = vmatprep.subr.bf16.mxu0 0
        %1120 = vmatpush1.bf16.msra.mxu0 0
        %1121 = vmatprep.mubr.bf16.mxu0 0
        %1122 = vmatmul.mubr.bf16.gmra.mrb[0].mxu0 %v1084
        %v1123 = vpop.f32.mrb[0].mxu0
        %v1124 = vadd.f32 %v1078, %v1123
        %v1125 = vpop.f32.mrb[0].mxu0
        %v1126 = vpop.f32.mrb[0].mxu0
        %v1127 = vpop.f32.mrb[0].mxu0
        %1128 = vdwg.mxu0
        %v1130 = vsel %vm580, %v1035, 0
        %v1133 = vsel %vm841, %v1031, 0
        %1135 = vmatprep.subr.bf16.mxu0 0
        %1136 = vmatpush1.bf16.msra.mxu0 %v1133
        %1137 = vmatprep.subr.bf16.mxu0 0
        %1138 = vmatpush1.bf16.msra.mxu0 0
        %1139 = vmatprep.subr.bf16.mxu0 0
        %1140 = vmatpush1.bf16.msra.mxu0 0
        %1141 = vmatprep.subr.bf16.mxu0 0
        %1142 = vmatpush1.bf16.msra.mxu0 0
        %1143 = vmatprep.subr.bf16.mxu0 0
        %1144 = vmatpush1.bf16.msra.mxu0 0
        %1145 = vmatprep.subr.bf16.mxu0 0
        %1146 = vmatpush1.bf16.msra.mxu0 0
        %1147 = vmatprep.subr.bf16.mxu0 0
        %1148 = vmatpush1.bf16.msra.mxu0 0
        %1149 = vmatprep.subr.bf16.mxu0 0
        %1150 = vmatpush1.bf16.msra.mxu0 0
        %1151 = vmatprep.subr.bf16.mxu0 0
        %1152 = vmatpush1.bf16.msra.mxu0 0
        %1153 = vmatprep.subr.bf16.mxu0 0
        %1154 = vmatpush1.bf16.msra.mxu0 0
        %1155 = vmatprep.subr.bf16.mxu0 0
        %1156 = vmatpush1.bf16.msra.mxu0 0
        %1157 = vmatprep.subr.bf16.mxu0 0
        %1158 = vmatpush1.bf16.msra.mxu0 0
        %1159 = vmatprep.subr.bf16.mxu0 0
        %1160 = vmatpush1.bf16.msra.mxu0 0
        %1161 = vmatprep.subr.bf16.mxu0 0
        %1162 = vmatpush1.bf16.msra.mxu0 0
        %1163 = vmatprep.subr.bf16.mxu0 0
        %1164 = vmatpush1.bf16.msra.mxu0 0
        %1165 = vmatprep.subr.bf16.mxu0 0
        %1166 = vmatpush1.bf16.msra.mxu0 0
        %1167 = vmatprep.mubr.bf16.mxu0 0
        %1168 = vmatmul.mubr.bf16.gmra.mrb[0].mxu0 %v1130
        %v1169 = vpop.f32.mrb[0].mxu0
        %v1170 = vadd.f32 0.0, %v1169
        %v1171 = vpop.f32.mrb[0].mxu0
        %v1172 = vpop.f32.mrb[0].mxu0
        %v1173 = vpop.f32.mrb[0].mxu0
        %1174 = vdwg.mxu0
        %v1175 = vadd.f32 %v1124, %v1170
        %v1177 = vsel %vm580, %v1036, 0
        %v1180 = vsel %vm841, %v1032, 0
        %1182 = vmatprep.subr.bf16.mxu0 0
        %1183 = vmatpush1.bf16.msra.mxu0 %v1180
        %1184 = vmatprep.subr.bf16.mxu0 0
        %1185 = vmatpush1.bf16.msra.mxu0 0
        %1186 = vmatprep.subr.bf16.mxu0 0
        %1187 = vmatpush1.bf16.msra.mxu0 0
        %1188 = vmatprep.subr.bf16.mxu0 0
        %1189 = vmatpush1.bf16.msra.mxu0 0
        %1190 = vmatprep.subr.bf16.mxu0 0
        %1191 = vmatpush1.bf16.msra.mxu0 0
        %1192 = vmatprep.subr.bf16.mxu0 0
        %1193 = vmatpush1.bf16.msra.mxu0 0
        %1194 = vmatprep.subr.bf16.mxu0 0
        %1195 = vmatpush1.bf16.msra.mxu0 0
        %1196 = vmatprep.subr.bf16.mxu0 0
        %1197 = vmatpush1.bf16.msra.mxu0 0
        %1198 = vmatprep.subr.bf16.mxu0 0
        %1199 = vmatpush1.bf16.msra.mxu0 0
        %1200 = vmatprep.subr.bf16.mxu0 0
        %1201 = vmatpush1.bf16.msra.mxu0 0
        %1202 = vmatprep.subr.bf16.mxu0 0
        %1203 = vmatpush1.bf16.msra.mxu0 0
        %1204 = vmatprep.subr.bf16.mxu0 0
        %1205 = vmatpush1.bf16.msra.mxu0 0
        %1206 = vmatprep.subr.bf16.mxu0 0
        %1207 = vmatpush1.bf16.msra.mxu0 0
        %1208 = vmatprep.subr.bf16.mxu0 0
        %1209 = vmatpush1.bf16.msra.mxu0 0
        %1210 = vmatprep.subr.bf16.mxu0 0
        %1211 = vmatpush1.bf16.msra.mxu0 0
        %1212 = vmatprep.subr.bf16.mxu0 0
        %1213 = vmatpush1.bf16.msra.mxu0 0
        %1214 = vmatprep.mubr.bf16.mxu0 0
        %1215 = vmatmul.mubr.bf16.gmra.mrb[0].mxu0 %v1177
        %v1216 = vpop.f32.mrb[0].mxu0
        %v1217 = vadd.f32 0.0, %v1216
        %v1218 = vpop.f32.mrb[0].mxu0
        %v1219 = vpop.f32.mrb[0].mxu0
        %v1220 = vpop.f32.mrb[0].mxu0
        %1221 = vdwg.mxu0
        %v1222 = vadd.f32 %v1175, %v1217
        %v1223 = vld [vmem:[%s5] sm:$0x1]
        %v1225 = vlaneseq
        %v1226 = vshrl.u32 %v1225, 7
        %v1227 = vsub.s32 0, %v1226
        %v1228 = vrot.slane %v1223, %v1227
        %v1230 = vadd.f32 %v1222, %v1228
        %v1231 = vadd.f32 %v493, %v1230
        %v1232 = vld [vmem:[%s6] sm:$0x1]
        %v1233 = vld [vmem:[%s7] sm:$0x1]
        %v1234 = vsel %vm519, %v1231, 0.0
        %1235 = vadd.xlane.f32.xlu0 %v1234
        %v1236 = vpop.xlane.xlu0 %1235
        %v1237 = vrcp.pop 32.0
        %v1238 = vmul.f32 %v1236, %v1237
        %v1239 = vsub.f32 %v1231, %v1238
        %v1240 = vmul.f32 %v1239, %v1239
        %v1241 = vsel %vm519, %v1240, 0.0
        %1242 = vadd.xlane.f32.xlu0 %v1241
        %v1243 = vpop.xlane.xlu0 %1242
        %v1244 = vmul.f32 %v1243, %v1237
        %v1245 = vadd.f32 %v1244, 1e-05
        %v1246 = vrsqrt.pop %v1245
        %v1247 = vmul.f32 %v1239, %v1246
        %v1249 = vlaneseq
        %v1250 = vshrl.u32 %v1249, 7
        %v1251 = vsub.s32 0, %v1250
        %v1252 = vrot.slane %v1232, %v1251
        %v1254 = vmul.f32 %v1247, %v1252
        %v1256 = vlaneseq
        %v1257 = vshrl.u32 %v1256, 7
        %v1258 = vsub.s32 0, %v1257
        %v1259 = vrot.slane %v1233, %v1258
        %v1261 = vadd.f32 %v1254, %v1259
        %v1262 = vpack.c.bf16 %v1261, %v1261
        %v1263 = vld [vmem:[#allocation2] sm:$0xf]
        %v1264 = vld [vmem:[#allocation2 + $0x4] sm:$0xf]
        %v1265 = vld [vmem:[#allocation2 + $0x8] sm:$0xf]
        %v1266 = vld [vmem:[#allocation2 + $0xc] sm:$0xf]
        %v1267 = vld [vmem:[%s9] sm:$0x1]
        %v1269 = vlaneseq
        %v1270 = vshrl.u32 %v1269, 7
        %v1271 = vsub.s32 0, %v1270
        %v1272 = vrot.slane %v1267, %v1271
        %v1278 = vunpack.c.l.b16 %v1263
        %v1279 = vunpack.c.l.b16 %v1264
        %v1280 = vunpack.c.l.b16 %v1265
        %v1281 = vunpack.c.l.b16 %v1266
        %v1282 = vpack.c.b16 %v1279, %v1278
        %v1283 = vpack.c.b16 %v1281, %v1280
        %v1287 = vsel %vm519, %v1262, 0
        %1289 = vmatprep.subr.bf16.mxu0 0
        %1290 = vmatpush1.bf16.msra.mxu0 %v1282
        %1291 = vmatprep.subr.bf16.mxu0 0
        %1292 = vmatpush1.bf16.msra.mxu0 %v1283
        %1293 = vmatprep.subr.bf16.mxu0 0
        %1294 = vmatpush1.bf16.msra.mxu0 0
        %1295 = vmatprep.subr.bf16.mxu0 0
        %1296 = vmatpush1.bf16.msra.mxu0 0
        %1297 = vmatprep.subr.bf16.mxu0 0
        %1298 = vmatpush1.bf16.msra.mxu0 0
        %1299 = vmatprep.subr.bf16.mxu0 0
        %1300 = vmatpush1.bf16.msra.mxu0 0
        %1301 = vmatprep.subr.bf16.mxu0 0
        %1302 = vmatpush1.bf16.msra.mxu0 0
        %1303 = vmatprep.subr.bf16.mxu0 0
        %1304 = vmatpush1.bf16.msra.mxu0 0
        %1305 = vmatprep.subr.bf16.mxu0 0
        %1306 = vmatpush1.bf16.msra.mxu0 0
        %1307 = vmatprep.subr.bf16.mxu0 0
        %1308 = vmatpush1.bf16.msra.mxu0 0
        %1309 = vmatprep.subr.bf16.mxu0 0
        %1310 = vmatpush1.bf16.msra.mxu0 0
        %1311 = vmatprep.subr.bf16.mxu0 0
        %1312 = vmatpush1.bf16.msra.mxu0 0
        %1313 = vmatprep.subr.bf16.mxu0 0
        %1314 = vmatpush1.bf16.msra.mxu0 0
        %1315 = vmatprep.subr.bf16.mxu0 0
        %1316 = vmatpush1.bf16.msra.mxu0 0
        %1317 = vmatprep.subr.bf16.mxu0 0
        %1318 = vmatpush1.bf16.msra.mxu0 0
        %1319 = vmatprep.subr.bf16.mxu0 0
        %1320 = vmatpush1.bf16.msra.mxu0 0
        %1321 = vmatprep.mubr.bf16.mxu0 0
        %1322 = vmatmul.mubr.bf16.gmra.mrb[0].mxu0 %v1287
        %v1323 = vpop.f32.mrb[0].mxu0
        %v1324 = vadd.f32 %v1272, %v1323
        %v1325 = vpop.f32.mrb[0].mxu0
        %v1326 = vpop.f32.mrb[0].mxu0
        %v1327 = vpop.f32.mrb[0].mxu0
        %1328 = vdwg.mxu0
        %v1329 = vmax.f32 %v1324, 0.0
        %v1330 = vpack.c.bf16 %v1329, %v1329
        %v1331 = vld [vmem:[%s10] sm:$0xf]
        %v1332 = vld [vmem:[%s10 + $0x4] sm:$0xf]
        %v1333 = vld [vmem:[%s10 + $0x8] sm:$0xf]
        %v1334 = vld [vmem:[%s10 + $0xc] sm:$0xf]
        %v1335 = vld [vmem:[%s10 + $0x10] sm:$0xf]
        %v1336 = vld [vmem:[%s10 + $0x14] sm:$0xf]
        %v1337 = vld [vmem:[%s10 + $0x18] sm:$0xf]
        %v1338 = vld [vmem:[%s10 + $0x1c] sm:$0xf]
        %v1339 = vld [vmem:[%s11] sm:$0x1]
        %v1341 = vlaneseq
        %v1342 = vshrl.u32 %v1341, 7
        %v1343 = vsub.s32 0, %v1342
        %v1344 = vrot.slane %v1339, %v1343
        %v1354 = vunpack.c.l.b16 %v1331
        %v1355 = vunpack.c.l.b16 %v1332
        %v1356 = vunpack.c.l.b16 %v1333
        %v1357 = vunpack.c.l.b16 %v1334
        %v1358 = vunpack.c.l.b16 %v1335
        %v1359 = vunpack.c.l.b16 %v1336
        %v1360 = vunpack.c.l.b16 %v1337
        %v1361 = vunpack.c.l.b16 %v1338
        %v1362 = vpack.c.b16 %v1355, %v1354
        %v1363 = vpack.c.b16 %v1357, %v1356
        %v1364 = vpack.c.b16 %v1359, %v1358
        %v1365 = vpack.c.b16 %v1361, %v1360
        %vm1370 = vcmask 523264
        %v1372 = vsel %vm1370, %v1330, 0
        %1374 = vmatprep.subr.bf16.mxu0 0
        %1375 = vmatpush1.bf16.msra.mxu0 %v1362
        %1376 = vmatprep.subr.bf16.mxu0 0
        %1377 = vmatpush1.bf16.msra.mxu0 %v1363
        %1378 = vmatprep.subr.bf16.mxu0 0
        %1379 = vmatpush1.bf16.msra.mxu0 %v1364
        %1380 = vmatprep.subr.bf16.mxu0 0
        %1381 = vmatpush1.bf16.msra.mxu0 %v1365
        %1382 = vmatprep.subr.bf16.mxu0 0
        %1383 = vmatpush1.bf16.msra.mxu0 0
        %1384 = vmatprep.subr.bf16.mxu0 0
        %1385 = vmatpush1.bf16.msra.mxu0 0
        %1386 = vmatprep.subr.bf16.mxu0 0
        %1387 = vmatpush1.bf16.msra.mxu0 0
        %1388 = vmatprep.subr.bf16.mxu0 0
        %1389 = vmatpush1.bf16.msra.mxu0 0
        %1390 = vmatprep.subr.bf16.mxu0 0
        %1391 = vmatpush1.bf16.msra.mxu0 0
        %1392 = vmatprep.subr.bf16.mxu0 0
        %1393 = vmatpush1.bf16.msra.mxu0 0
        %1394 = vmatprep.subr.bf16.mxu0 0
        %1395 = vmatpush1.bf16.msra.mxu0 0
        %1396 = vmatprep.subr.bf16.mxu0 0
        %1397 = vmatpush1.bf16.msra.mxu0 0
        %1398 = vmatprep.subr.bf16.mxu0 0
        %1399 = vmatpush1.bf16.msra.mxu0 0
        %1400 = vmatprep.subr.bf16.mxu0 0
        %1401 = vmatpush1.bf16.msra.mxu0 0
        %1402 = vmatprep.subr.bf16.mxu0 0
        %1403 = vmatpush1.bf16.msra.mxu0 0
        %1404 = vmatprep.subr.bf16.mxu0 0
        %1405 = vmatpush1.bf16.msra.mxu0 0
        %1406 = vmatprep.mubr.bf16.mxu0 0
        %1407 = vmatmul.mubr.bf16.gmra.mrb[0].mxu0 %v1372
        %v1408 = vpop.f32.mrb[0].mxu0
        %v1409 = vadd.f32 %v1344, %v1408
        %v1410 = vpop.f32.mrb[0].mxu0
        %v1411 = vpop.f32.mrb[0].mxu0
        %v1412 = vpop.f32.mrb[0].mxu0
        %1413 = vdwg.mxu0
        %v1414 = vadd.f32 %v1261, %v1409
        %v1415 = vld [vmem:[%s12] sm:$0x1]
        %v1416 = vld [vmem:[%s13] sm:$0x1]
        %v1417 = vsel %vm519, %v1414, 0.0
        %1418 = vadd.xlane.f32.xlu0 %v1417
        %v1419 = vpop.xlane.xlu0 %1418
        %v1420 = vmul.f32 %v1419, %v1237
        %v1421 = vsub.f32 %v1414, %v1420
        %v1422 = vmul.f32 %v1421, %v1421
        %v1423 = vsel %vm519, %v1422, 0.0
        %1424 = vadd.xlane.f32.xlu0 %v1423
        %v1425 = vpop.xlane.xlu0 %1424
        %v1426 = vmul.f32 %v1425, %v1237
        %v1427 = vadd.f32 %v1426, 1e-05
        %v1428 = vrsqrt.pop %v1427
        %v1429 = vmul.f32 %v1421, %v1428
        %v1431 = vlaneseq
        %v1432 = vshrl.u32 %v1431, 7
        %v1433 = vsub.s32 0, %v1432
        %v1434 = vrot.slane %v1415, %v1433
        %v1436 = vmul.f32 %v1429, %v1434
        %v1438 = vlaneseq
        %v1439 = vshrl.u32 %v1438, 7
        %v1440 = vsub.s32 0, %v1439
        %v1441 = vrot.slane %v1416, %v1440
        %v1443 = vadd.f32 %v1436, %v1441
        %1444 = vst.msk [vmem:[%s484] sm:$0xff] %vm519, %v1443
        %s1445 = sand.u32 %s341, 1
        %s1446 = scalar_lea.sflag [#allocation4], %s1445
        %s1447 = sand.u32 %s341, 1
        %s1448 = smul.addr %s1447, 8
        %s1449 = scalar_lea.vmem [#allocation5], %s1448
        // Predicated region
        $region81: #{tpu_custom_call.1} parent=75 // pred_check
          %p1450 = pneg %p351
        $region82: #{tpu_custom_call.1} parent=75 // pred_check_branch
          %1452 = sbr.rel (%p1450) target = $region84
        $region83: #{tpu_custom_call.1} parent=75 // pred_region
          %s1454 = ssub.s32 128, 128
          %1455 = vsyncadd %s1446, %s1454
          %s1456 = smul.addr %s29, 128
          %s1457 = scalar_lea.hbm %s14, %s1456
          %s1459 = sshll.u32 %s1449, 4
          %s1460 = int_to_ptr.vmem [resolvable:$true] %s1459
          %1462 = dma.vmem_to_hbm [thread:$0]  %s1460, 128, %s1457, %s1446
        $region84: #{tpu_custom_call.1} parent=75 // pred_fallthru
          _
      $region76: #{tpu_custom_call.1} parent=5 // pred_fallthru
        _
      %p1463 = scmp.le.s32.totalorder 2, %s24
      // Predicated region
      $region85: #{tpu_custom_call.1} parent=5 // pred_check
        %p1464 = pneg %p1463
      $region86: #{tpu_custom_call.1} parent=5 // pred_check_branch
        %1466 = sbr.rel (%p1464) target = $region88
      $region87: #{tpu_custom_call.1} parent=5 // pred_region
        %s1467 = ssub.s32 %s24, 2
        // Predicated region
        $region89: #{tpu_custom_call.1} parent=87 // pred_check
          %p1468 = pneg %p357
        $region90: #{tpu_custom_call.1} parent=87 // pred_check_branch
          %1470 = sbr.rel (%p1468) target = $region92
        $region91: #{tpu_custom_call.1} parent=87 // pred_region
          %s1471 = sand.u32 %s342, 1
          %s1472 = scalar_lea.sflag [#allocation4], %s1471
          %s1473 = sand.u32 %s342, 1
          %s1474 = smul.addr %s1473, 8
          %s1475 = scalar_lea.vmem [#allocation5], %s1474
          %1476 = dma.done %s1472, 128
        $region92: #{tpu_custom_call.1} parent=87 // pred_fallthru
          _
      $region88: #{tpu_custom_call.1} parent=5 // pred_fallthru
        _
    $region6: #{tpu_custom_call.1} parent=1 // loop_footer
      %s28 = sadd.s32 1, %s24
    $region7: #{tpu_custom_call.1} parent=1 // loop_footer_branch
      %23 = sbr.rel target = $region3
    $region8: #{tpu_custom_call.1} parent=1 // loop_exit
      _
    %1477 = vsyncpa [#allocation3], 1
    %s1478 = scalar_lea.sflag [#allocation3], 1
    %1479 = vsyncpa %s1478, 1
    %1480 = vsyncpa [#allocation4], 1
    %s1481 = scalar_lea.sflag [#allocation4], 1
    %1482 = vsyncpa %s1481, 1

</llo_original>
